<compile_context>
chip_gen: v7x
topology: tpu7x:2x2x1
jax: 0.10.0
libtpu: 0.0.40
codegen_flags: <defaults>
</compile_context>

<pallas_src>
import jax
import jax.numpy as jnp
from jax import lax
from jax.experimental import pallas as pl
from jax.experimental.pallas import tpu as pltpu


# ----------------------------------------------------------------------------
# Routing path kernel (use_routing=True)
# ----------------------------------------------------------------------------
NUM_ROUTING_ITERATIONS = 3


def routing_kernel(x_ref, w_ref, msp_ref, msj_ref, v_ref):
    # x_ref  : (IC, B, IU)        f32
    # w_ref  : (IC, IU, NU*US)    f32
    # msp_ref: (NU*US, NU*US)     f32   1 iff same p (squash group: sum across j)
    # msj_ref: (NU*US, NU*US)     f32   1 iff same j (agreement group: sum across p)
    # v_ref  : (B, NU*US)         f32
    x = x_ref[...]
    w = w_ref[...]
    IC, B, _ = x.shape
    NUS = w.shape[-1]

    # u_hat[c, b, j*US+p] = sum_i W[c, j, p, i] * x[b, c, i]
    # One IC-batched MXU contraction over the in_units dim; computed once, reused
    # by all routing iterations.
    u_hat = lax.dot_general(
        x, w,
        dimension_numbers=(((2,), (1,)), ((0,), (0,))),
        preferred_element_type=jnp.float32)               # (IC, B, NUS)

    m_same_p = msp_ref[...]
    m_same_j = msj_ref[...]

    b_exp = jnp.zeros((IC, NUS), jnp.float32)   # b_ij logits, replicated over p
    v = jnp.zeros((B, NUS), jnp.float32)
    inv_b = jnp.float32(1.0 / B)

    for it in range(NUM_ROUTING_ITERATIONS):
        if it == 0:
            # softmax of all-zero logits is exactly uniform: skip the exp / reduces.
            c_exp = jnp.full((IC, NUS), 1.0 / IC, jnp.float32)
        else:
            # c_ij = softmax(b_ij, dim=in_channels)  -> reduce over IC (axis 0)
            mx = jnp.max(b_exp, axis=0, keepdims=True)
            e = jnp.exp(b_exp - mx)
            c_exp = e / jnp.sum(e, axis=0, keepdims=True)  # (IC, NUS)

        # s_j[b, j, p] = sum_c c_ij[c, j] * u_hat[b, c, j, p]
        # (mul + accumulate across the major IC axis -> pure VPU adds)
        s = jnp.sum(c_exp[:, None, :] * u_hat, axis=0)     # (B, NUS)

        # squash over the num_units dim (torch squash dim=2 of (B,1,NU,US,1)):
        # mag_sq[b, p] = sum_j s[b, j, p]^2, via an MXU group-sum matmul.
        mag_sq = jnp.dot(s * s, m_same_p,
                         preferred_element_type=jnp.float32)    # (B, NUS)
        scale = jnp.sqrt(mag_sq) * pl.reciprocal(1.0 + mag_sq)  # NaN-free squash
        v = scale * s                                       # (B, NUS)

        # b_ij[c, j] += mean_b sum_p u_hat[b, c, j, p] * v[b, j, p]
        t = jnp.sum(u_hat * v[None, :, :], axis=1)          # (IC, NUS)  (sum over B)
        b_exp = b_exp + jnp.dot(t, m_same_j,
                                preferred_element_type=jnp.float32) * inv_b

    v_ref[...] = v.astype(v_ref.dtype)                      # single lane-dense store


@jax.jit
def capsule_routing_forward(x, W):
    """x: (B, in_units, in_channels); W: (1, in_channels, num_units, unit_size, in_units).
    Returns (B, num_units, unit_size, 1) like the PyTorch routing() output."""
    B, IU, IC = x.shape
    _, _, NU, US, _ = W.shape
    NUS = NU * US
    # layout plumbing done in the wrapper (XLA), not in-kernel
    x_t = jnp.transpose(x, (2, 0, 1)).astype(jnp.float32)                     # (IC, B, IU)
    w_t = jnp.transpose(W[0], (0, 3, 1, 2)).reshape(IC, IU, NUS)              # (IC, IU, NUS)
    w_t = w_t.astype(jnp.float32)
    idx = jnp.arange(NUS)
    m_same_p = (idx[:, None] % US == idx[None, :] % US).astype(jnp.float32)    # squash group
    m_same_j = (idx[:, None] // US == idx[None, :] // US).astype(jnp.float32)  # agreement group

    # TODO(synk): for real CapsNet sizes (IC~1152, large B) this whole-array-in-VMEM
    # kernel should be restructured with a batch-tiled "parallel" grid (and bf16 u_hat)
    # so u_hat fits v7x's 64 MiB VMEM and both TensorCores are used; the batch-mean in
    # the b_ij update then needs a cross-step accumulator.
    v = pl.pallas_call(
        routing_kernel,
        out_shape=jax.ShapeDtypeStruct((B, NUS), jnp.float32),
        in_specs=[pl.BlockSpec(memory_space=pltpu.MemorySpace.VMEM) for _ in range(4)],
        out_specs=pl.BlockSpec(memory_space=pltpu.MemorySpace.VMEM),
    )(x_t, w_t, m_same_p, m_same_j)
    return v.reshape(B, NU, US)[..., None]                  # (B, NU, US, 1)


# ----------------------------------------------------------------------------
# No-routing path kernel (use_routing=False): stacked ConvUnits + squash
# ----------------------------------------------------------------------------
def conv_caps_kernel(p_ref, w_ref, b_ref, g_ref, o_ref):
    # p_ref: (BB, P, F) bf16 patches for BB images
    # w_ref: (F, NU*OC) bf16 stacked conv weights (resident across the batch grid)
    # b_ref: (1, NU*OC) f32 stacked biases
    # g_ref: (NU*OC, NU*OC) f32, 1 iff same capsule unit (block-diagonal over OC)
    # o_ref: (BB, P, NU*OC) f32  -- 128-lane-dense output block
    conv = lax.dot_general(
        p_ref[...], w_ref[...],
        dimension_numbers=(((2,), (0,)), ((), ())),
        preferred_element_type=jnp.float32)                       # (BB, P, NUOC)
    conv = conv + b_ref[...]
    # squash over each unit's flattened (OC * P) capsule vector, per image:
    colsum = jnp.sum(conv * conv, axis=1)                         # (BB, NUOC)
    mag_sq = jnp.dot(colsum, g_ref[...], preferred_element_type=jnp.float32)
    scale = jnp.sqrt(mag_sq) * pl.reciprocal(1.0 + mag_sq, approx=True)
    o_ref[...] = (conv * scale[:, None, :]).astype(o_ref.dtype)


def _im2col_nchw(x, k, s):
    """Pure data re-layout (JAX glue). Feature order is (c, kh, kw), matching
    torch conv weight.reshape(OC, C*k*k). Returns (B, P, F) patches."""
    B, C, H, W = x.shape
    Ho = (H - k) // s + 1
    Wo = (W - k) // s + 1
    cols = []
    for kh in range(k):
        for kw in range(k):
            cols.append(x[:, :, kh:kh + s * (Ho - 1) + 1:s, kw:kw + s * (Wo - 1) + 1:s])
    p = jnp.stack(cols, axis=2)                       # (B, C, k*k, Ho, Wo)
    p = p.reshape(B, C * k * k, Ho * Wo)              # (B, F, P)
    return jnp.transpose(p, (0, 2, 1)), Ho, Wo        # (B, P, F)


def _pick_block_b(B, P, F, NUOC):
    """Largest divisor of B whose double-buffered per-step footprint stays ~< 8 MiB."""
    budget = 8 * 1024 * 1024
    per_img = 2 * (P * F * 2) + 2 * (P * NUOC * 4)    # bf16 patches x2 bufs + f32 out x2 bufs
    bb = max(1, min(B, budget // max(per_img, 1)))
    while B % bb:
        bb -= 1
    return bb


@jax.jit
def capsule_no_routing_forward(x, conv_w, conv_b):
    """x: NCHW (B, C, H, W); conv_w: (NU, 32, C, 9, 9); conv_b: (NU, 32).
    Returns (B, NU, 32*Ho*Wo) like the PyTorch no_routing() output."""
    B, C, H, W = x.shape
    NU, OC = conv_w.shape[:2]
    NUOC = NU * OC
    patches, Ho, Wo = _im2col_nchw(x.astype(jnp.float32), 9, 2)           # (B, P, F)
    P = Ho * Wo
    F = C * 81
    # bf16 matmul operands, f32 accumulate / elementwise (v6e/v7x MXU-friendly)
    patches = patches.astype(jnp.bfloat16)
    w_flat = jnp.transpose(conv_w.reshape(NUOC, F), (1, 0)).astype(jnp.bfloat16)  # (F, NUOC)
    b_flat = conv_b.reshape(1, NUOC).astype(jnp.float32)
    idx = jnp.arange(NUOC)
    g_unit = (idx[:, None] // OC == idx[None, :] // OC).astype(jnp.float32)

    BB = _pick_block_b(B, P, F, NUOC)
    out = pl.pallas_call(
        conv_caps_kernel,
        out_shape=jax.ShapeDtypeStruct((B, P, NUOC), jnp.float32),
        grid=(B // BB,),
        in_specs=[
            pl.BlockSpec((BB, P, F), lambda b: (b, 0, 0)),       # BB images of patches
            pl.BlockSpec((F, NUOC), lambda b: (0, 0)),           # weights, fetched once
            pl.BlockSpec((1, NUOC), lambda b: (0, 0)),
            pl.BlockSpec((NUOC, NUOC), lambda b: (0, 0)),
        ],
        out_specs=pl.BlockSpec((BB, P, NUOC), lambda b: (b, 0, 0)),
        compiler_params=pltpu.CompilerParams(
            dimension_semantics=("parallel",)),
    )(patches, w_flat, b_flat, g_unit)
    # (B, P, NU*OC) -> (B, NU, OC, P) -> (B, NU, OC*Ho*Wo): matches torch's
    # view(B, NU, -1) flattening order (oc, ho, wo).
    out = jnp.transpose(out.reshape(B, P, NU, OC), (0, 2, 3, 1)).reshape(B, NU, OC * P)
    return out


# ----------------------------------------------------------------------------
# Pure-JAX references (semantic mirror of the PyTorch code) for validation
# ----------------------------------------------------------------------------
def routing_reference(x, W):
    Wb = W[0]                                        # (IC, NU, US, IU)
    xt = jnp.swapaxes(x, 1, 2)                       # (B, IC, IU)
    u_hat = jnp.einsum('cjpi,bci->bcjp', Wb, xt)     # (B, IC, NU, US)
    IC, NU = Wb.shape[0], Wb.shape[1]
    b_ij = jnp.zeros((IC, NU), jnp.float32)
    v_j = None
    for _ in range(NUM_ROUTING_ITERATIONS):
        c_ij = jax.nn.softmax(b_ij, axis=0)
        s_j = jnp.einsum('cj,bcjp->bjp', c_ij, u_hat)
        mag_sq = jnp.sum(s_j ** 2, axis=1, keepdims=True)   # squash over NU (torch dim=2)
        mag = jnp.sqrt(mag_sq)
        v_j = mag_sq / (1.0 + mag_sq) * (s_j / mag)
        u_vj = jnp.einsum('bcjp,bjp->bcj', u_hat, v_j)
        b_ij = b_ij + jnp.mean(u_vj, axis=0)
    return v_j[..., None]


def no_routing_reference(x, conv_w, conv_b):
    B = x.shape[0]
    NU = conv_w.shape[0]
    outs = []
    for n in range(NU):
        o = jax.lax.conv_general_dilated(
            x, conv_w[n], window_strides=(2, 2), padding='VALID',
            dimension_numbers=('NCHW', 'OIHW', 'NCHW'))
        outs.append(o + conv_b[n][None, :, None, None])
    u = jnp.stack(outs, axis=1).reshape(B, NU, -1)
    mag_sq = jnp.sum(u ** 2, axis=2, keepdims=True)
    mag = jnp.sqrt(mag_sq)
    return mag_sq / (1.0 + mag_sq) * (u / mag)


# ----------------------------------------------------------------------------
if __name__ == "__main__":
    key = jax.random.PRNGKey(0)
    k1, k2, k3, k4, k5 = jax.random.split(key, 5)

    # ---- use_routing=True ----
    B, in_units, in_channels, num_units, unit_size = 2, 8, 16, 4, 16
    x_route = jax.random.normal(k1, (B, in_units, in_channels), jnp.float32)
    W = jax.random.normal(k2, (1, in_channels, num_units, unit_size, in_units),
                          jnp.float32)
    v = jax.block_until_ready(capsule_routing_forward(x_route, W))
    v_ref = routing_reference(x_route, W)
    assert v.shape == (B, num_units, unit_size, 1), v.shape
    assert bool(jnp.allclose(v, v_ref, atol=1e-2, rtol=1e-2)), "routing mismatch"

    # ---- use_routing=False ----
    Bn, C, H, Wd = 2, 4, 16, 16
    x_conv = jax.random.normal(k3, (Bn, C, H, Wd), jnp.float32)
    conv_w = jax.random.normal(k4, (num_units, 32, C, 9, 9), jnp.float32) * 0.05
    conv_b = jax.random.normal(k5, (num_units, 32), jnp.float32) * 0.05
    u = jax.block_until_ready(capsule_no_routing_forward(x_conv, conv_w, conv_b))
    u_ref = no_routing_reference(x_conv, conv_w, conv_b)
    Ho = (H - 9) // 2 + 1
    assert u.shape == (Bn, num_units, 32 * Ho * Ho), u.shape
    assert bool(jnp.allclose(u, u_ref, atol=2e-2, rtol=2e-2)), "no_routing mismatch"

    print("KERNEL_OK")
</pallas_src>

<mosaic_0001>
module attributes {stable_mosaic.version = 11 : i64} {
  func.func @routing_kernel(%arg0: memref<16x2x8xf32, #tpu.memory_space<vmem>>, %arg1: memref<16x8x64xf32, #tpu.memory_space<vmem>>, %arg2: memref<64x64xf32, #tpu.memory_space<vmem>>, %arg3: memref<64x64xf32, #tpu.memory_space<vmem>>, %arg4: memref<2x64xf32, #tpu.memory_space<vmem>>) attributes {dimension_semantics = [], scalar_prefetch = 0 : i64, scratch_operands = 0 : i64, tpu.core_type = #tpu.core_type<tc>} {
    %c0 = arith.constant 0 : index
    %c0_0 = arith.constant 0 : index
    %c0_1 = arith.constant 0 : index
    %0 = vector.load %arg0[%c0, %c0_0, %c0_1] : memref<16x2x8xf32, #tpu.memory_space<vmem>>, vector<16x2x8xf32>
    %c0_2 = arith.constant 0 : index
    %c0_3 = arith.constant 0 : index
    %c0_4 = arith.constant 0 : index
    %1 = vector.load %arg1[%c0_2, %c0_3, %c0_4] : memref<16x8x64xf32, #tpu.memory_space<vmem>>, vector<16x8x64xf32>
    %cst = arith.constant dense<0.000000e+00> : vector<16x2x64xf32>
    %2 = tpu.matmul %0, %1, %cst {dimension_numbers = #tpu.dot_dimension_numbers<[2], [1], [1], [2], [0, 0, 0, 1, 1, 2], [0], [0]>} : vector<16x2x8xf32>, vector<16x8x64xf32>, vector<16x2x64xf32> -> vector<16x2x64xf32>
    %c0_5 = arith.constant 0 : index
    %c0_6 = arith.constant 0 : index
    %3 = vector.load %arg2[%c0_5, %c0_6] : memref<64x64xf32, #tpu.memory_space<vmem>>, vector<64x64xf32>
    %c0_7 = arith.constant 0 : index
    %c0_8 = arith.constant 0 : index
    %4 = vector.load %arg3[%c0_7, %c0_8] : memref<64x64xf32, #tpu.memory_space<vmem>>, vector<64x64xf32>
    %cst_9 = arith.constant 0.000000e+00 : f32
    %5 = vector.broadcast %cst_9 : f32 to vector<16x64xf32>
    %cst_10 = arith.constant 6.250000e-02 : f32
    %6 = vector.broadcast %cst_10 : f32 to vector<16x64xf32>
    %7 = vector.shape_cast %6 : vector<16x64xf32> to vector<16x1x64xf32>
    %8 = vector.broadcast %7 : vector<16x1x64xf32> to vector<16x2x64xf32>
    %9 = arith.mulf %8, %2 : vector<16x2x64xf32>
    %cst_11 = arith.constant dense<0.000000e+00> : vector<2x64xf32>
    %10 = vector.multi_reduction <add>, %9, %cst_11 [0] : vector<16x2x64xf32> to vector<2x64xf32>
    %11 = arith.mulf %10, %10 : vector<2x64xf32>
    %cst_12 = arith.constant dense<0.000000e+00> : vector<2x64xf32>
    %12 = tpu.matmul %11, %3, %cst_12 {dimension_numbers = #tpu.dot_dimension_numbers<[1], [0], [0], [1], [0, 0, 1, 1], [], []>} : vector<2x64xf32>, vector<64x64xf32>, vector<2x64xf32> -> vector<2x64xf32>
    %13 = math.sqrt %12 : vector<2x64xf32>
    %cst_13 = arith.constant 1.000000e+00 : f32
    %14 = vector.broadcast %cst_13 : f32 to vector<2x64xf32>
    %15 = arith.addf %14, %12 : vector<2x64xf32>
    %16 = tpu.reciprocal %15 : vector<2x64xf32> -> vector<2x64xf32>
    %17 = arith.mulf %13, %16 : vector<2x64xf32>
    %18 = arith.mulf %17, %10 : vector<2x64xf32>
    %19 = vector.shape_cast %18 : vector<2x64xf32> to vector<1x2x64xf32>
    %20 = vector.broadcast %19 : vector<1x2x64xf32> to vector<16x2x64xf32>
    %21 = arith.mulf %2, %20 : vector<16x2x64xf32>
    %cst_14 = arith.constant dense<0.000000e+00> : vector<16x64xf32>
    %22 = vector.multi_reduction <add>, %21, %cst_14 [1] : vector<16x2x64xf32> to vector<16x64xf32>
    %cst_15 = arith.constant dense<0.000000e+00> : vector<16x64xf32>
    %23 = tpu.matmul %22, %4, %cst_15 {dimension_numbers = #tpu.dot_dimension_numbers<[1], [0], [0], [1], [0, 0, 1, 1], [], []>} : vector<16x64xf32>, vector<64x64xf32>, vector<16x64xf32> -> vector<16x64xf32>
    %cst_16 = arith.constant 5.000000e-01 : f32
    %24 = vector.broadcast %cst_16 : f32 to vector<16x64xf32>
    %25 = arith.mulf %23, %24 : vector<16x64xf32>
    %26 = arith.addf %5, %25 : vector<16x64xf32>
    %cst_17 = arith.constant dense<0xFF800000> : vector<64xf32>
    %27 = vector.multi_reduction <maximumf>, %26, %cst_17 [0] : vector<16x64xf32> to vector<64xf32>
    %28 = vector.shape_cast %27 : vector<64xf32> to vector<1x64xf32>
    %29 = vector.broadcast %28 : vector<1x64xf32> to vector<16x64xf32>
    %30 = arith.subf %26, %29 : vector<16x64xf32>
    %31 = math.exp %30 : vector<16x64xf32>
    %cst_18 = arith.constant dense<0.000000e+00> : vector<64xf32>
    %32 = vector.multi_reduction <add>, %31, %cst_18 [0] : vector<16x64xf32> to vector<64xf32>
    %33 = vector.shape_cast %32 : vector<64xf32> to vector<1x64xf32>
    %34 = vector.broadcast %33 : vector<1x64xf32> to vector<16x64xf32>
    %35 = arith.divf %31, %34 : vector<16x64xf32>
    %36 = vector.shape_cast %35 : vector<16x64xf32> to vector<16x1x64xf32>
    %37 = vector.broadcast %36 : vector<16x1x64xf32> to vector<16x2x64xf32>
    %38 = arith.mulf %37, %2 : vector<16x2x64xf32>
    %cst_19 = arith.constant dense<0.000000e+00> : vector<2x64xf32>
    %39 = vector.multi_reduction <add>, %38, %cst_19 [0] : vector<16x2x64xf32> to vector<2x64xf32>
    %40 = arith.mulf %39, %39 : vector<2x64xf32>
    %cst_20 = arith.constant dense<0.000000e+00> : vector<2x64xf32>
    %41 = tpu.matmul %40, %3, %cst_20 {dimension_numbers = #tpu.dot_dimension_numbers<[1], [0], [0], [1], [0, 0, 1, 1], [], []>} : vector<2x64xf32>, vector<64x64xf32>, vector<2x64xf32> -> vector<2x64xf32>
    %42 = math.sqrt %41 : vector<2x64xf32>
    %cst_21 = arith.constant 1.000000e+00 : f32
    %43 = vector.broadcast %cst_21 : f32 to vector<2x64xf32>
    %44 = arith.addf %43, %41 : vector<2x64xf32>
    %45 = tpu.reciprocal %44 : vector<2x64xf32> -> vector<2x64xf32>
    %46 = arith.mulf %42, %45 : vector<2x64xf32>
    %47 = arith.mulf %46, %39 : vector<2x64xf32>
    %48 = vector.shape_cast %47 : vector<2x64xf32> to vector<1x2x64xf32>
    %49 = vector.broadcast %48 : vector<1x2x64xf32> to vector<16x2x64xf32>
    %50 = arith.mulf %2, %49 : vector<16x2x64xf32>
    %cst_22 = arith.constant dense<0.000000e+00> : vector<16x64xf32>
    %51 = vector.multi_reduction <add>, %50, %cst_22 [1] : vector<16x2x64xf32> to vector<16x64xf32>
    %cst_23 = arith.constant dense<0.000000e+00> : vector<16x64xf32>
    %52 = tpu.matmul %51, %4, %cst_23 {dimension_numbers = #tpu.dot_dimension_numbers<[1], [0], [0], [1], [0, 0, 1, 1], [], []>} : vector<16x64xf32>, vector<64x64xf32>, vector<16x64xf32> -> vector<16x64xf32>
    %cst_24 = arith.constant 5.000000e-01 : f32
    %53 = vector.broadcast %cst_24 : f32 to vector<16x64xf32>
    %54 = arith.mulf %52, %53 : vector<16x64xf32>
    %55 = arith.addf %26, %54 : vector<16x64xf32>
    %cst_25 = arith.constant dense<0xFF800000> : vector<64xf32>
    %56 = vector.multi_reduction <maximumf>, %55, %cst_25 [0] : vector<16x64xf32> to vector<64xf32>
    %57 = vector.shape_cast %56 : vector<64xf32> to vector<1x64xf32>
    %58 = vector.broadcast %57 : vector<1x64xf32> to vector<16x64xf32>
    %59 = arith.subf %55, %58 : vector<16x64xf32>
    %60 = math.exp %59 : vector<16x64xf32>
    %cst_26 = arith.constant dense<0.000000e+00> : vector<64xf32>
    %61 = vector.multi_reduction <add>, %60, %cst_26 [0] : vector<16x64xf32> to vector<64xf32>
    %62 = vector.shape_cast %61 : vector<64xf32> to vector<1x64xf32>
    %63 = vector.broadcast %62 : vector<1x64xf32> to vector<16x64xf32>
    %64 = arith.divf %60, %63 : vector<16x64xf32>
    %65 = vector.shape_cast %64 : vector<16x64xf32> to vector<16x1x64xf32>
    %66 = vector.broadcast %65 : vector<16x1x64xf32> to vector<16x2x64xf32>
    %67 = arith.mulf %66, %2 : vector<16x2x64xf32>
    %cst_27 = arith.constant dense<0.000000e+00> : vector<2x64xf32>
    %68 = vector.multi_reduction <add>, %67, %cst_27 [0] : vector<16x2x64xf32> to vector<2x64xf32>
    %69 = arith.mulf %68, %68 : vector<2x64xf32>
    %cst_28 = arith.constant dense<0.000000e+00> : vector<2x64xf32>
    %70 = tpu.matmul %69, %3, %cst_28 {dimension_numbers = #tpu.dot_dimension_numbers<[1], [0], [0], [1], [0, 0, 1, 1], [], []>} : vector<2x64xf32>, vector<64x64xf32>, vector<2x64xf32> -> vector<2x64xf32>
    %71 = math.sqrt %70 : vector<2x64xf32>
    %cst_29 = arith.constant 1.000000e+00 : f32
    %72 = vector.broadcast %cst_29 : f32 to vector<2x64xf32>
    %73 = arith.addf %72, %70 : vector<2x64xf32>
    %74 = tpu.reciprocal %73 : vector<2x64xf32> -> vector<2x64xf32>
    %75 = arith.mulf %71, %74 : vector<2x64xf32>
    %76 = arith.mulf %75, %68 : vector<2x64xf32>
    %c0_30 = arith.constant 0 : index
    %c0_31 = arith.constant 0 : index
    %77 = vector.load %arg4[%c0_30, %c0_31] : memref<2x64xf32, #tpu.memory_space<vmem>>, vector<2x64xf32>
    tpu.vector_store %arg4[%c0_30, %c0_31], %76 {strides = array<i32>} : memref<2x64xf32, #tpu.memory_space<vmem>>, vector<2x64xf32>,
    return
  }
}

</mosaic_0001>

<llo_original>
// kernel: capsule_routing_forward.1
$region0: #{capsule_routing_forward.1}
  #allocation0 [shape = 'u32[]', space=smem, size = 0x4, offset = 0x4, fixed_abs, tag = 'smem constant byte address 0x4 - core index']
  #allocation1 [shape = 'u32[144,128]{1,0:T(1,128)}', space=vmem, size = 0x12000, scoped, tag = 'internal scratch']
  %s0 = inlined_call_operand.vmem [shape: f32[16,2,8], index: 0, kind: input, shape index: {}]
  %s1 = inlined_call_operand.vmem [shape: f32[16,8,64], index: 1, kind: input, shape index: {}]
  %s2 = inlined_call_operand.vmem [shape: f32[64,64], index: 2, kind: input, shape index: {}]
  %s3 = inlined_call_operand.vmem [shape: f32[64,64], index: 3, kind: input, shape index: {}]
  %s4 = inlined_call_operand.vmem [shape: f32[2,64], index: 4, kind: output, shape index: {}]
  %s5 = sld [smem:[#allocation0]]
  $region26: #{capsule_routing_forward.1} parent=0
    _
  %s7 = ssub.s32 1, %s5
  %s8 = scalar_select 0, %s7, %s5
  // Predicated region
  $region2: #{capsule_routing_forward.1} parent=0 // pred_check
    _
  $region3: #{capsule_routing_forward.1} parent=0 // pred_check_branch
    %10 = sbr.rel (0) target = $region5
  $region4: #{capsule_routing_forward.1} parent=0 // pred_region
    _
  $region5: #{capsule_routing_forward.1} parent=0 // pred_fallthru
    _
  // Predicated region
  $region6: #{capsule_routing_forward.1} parent=0 // pred_check
    _
  $region7: #{capsule_routing_forward.1} parent=0 // pred_check_branch
    %12 = sbr.rel (0) target = $region9
  $region8: #{capsule_routing_forward.1} parent=0 // pred_region
    _
  $region9: #{capsule_routing_forward.1} parent=0 // pred_fallthru
    _
  // Predicated region
  $region10: #{capsule_routing_forward.1} parent=0 // pred_check
    _
  $region11: #{capsule_routing_forward.1} parent=0 // pred_check_branch
    %14 = sbr.rel (0) target = $region13
  $region12: #{capsule_routing_forward.1} parent=0 // pred_region
    _
  $region13: #{capsule_routing_forward.1} parent=0 // pred_fallthru
    _
  // Predicated region
  $region14: #{capsule_routing_forward.1} parent=0 // pred_check
    _
  $region15: #{capsule_routing_forward.1} parent=0 // pred_check_branch
    %16 = sbr.rel (0) target = $region17
  $region16: #{capsule_routing_forward.1} parent=0 // pred_region
    _
  $region17: #{capsule_routing_forward.1} parent=0 // pred_fallthru
    _
  %v17 = vld [vmem:[%s0] sm:$0x3]
  %v18 = vld [vmem:[%s0 + $0x2] sm:$0x3]
  %v19 = vld [vmem:[%s0 + $0x4] sm:$0x3]
  %v20 = vld [vmem:[%s0 + $0x6] sm:$0x3]
  %v21 = vld [vmem:[%s0 + $0x8] sm:$0x3]
  %v22 = vld [vmem:[%s0 + $0xa] sm:$0x3]
  %v23 = vld [vmem:[%s0 + $0xc] sm:$0x3]
  %v24 = vld [vmem:[%s0 + $0xe] sm:$0x3]
  %v25 = vld [vmem:[%s0 + $0x10] sm:$0x3]
  %v26 = vld [vmem:[%s0 + $0x12] sm:$0x3]
  %v27 = vld [vmem:[%s0 + $0x14] sm:$0x3]
  %v28 = vld [vmem:[%s0 + $0x16] sm:$0x3]
  %v29 = vld [vmem:[%s0 + $0x18] sm:$0x3]
  %v30 = vld [vmem:[%s0 + $0x1a] sm:$0x3]
  %v31 = vld [vmem:[%s0 + $0x1c] sm:$0x3]
  %v32 = vld [vmem:[%s0 + $0x1e] sm:$0x3]
  %v33 = vld [vmem:[%s1] sm:$0xff]
  %v34 = vld [vmem:[%s1 + $0x8] sm:$0xff]
  %v35 = vld [vmem:[%s1 + $0x10] sm:$0xff]
  %v36 = vld [vmem:[%s1 + $0x18] sm:$0xff]
  %v37 = vld [vmem:[%s1 + $0x20] sm:$0xff]
  %v38 = vld [vmem:[%s1 + $0x28] sm:$0xff]
  %v39 = vld [vmem:[%s1 + $0x30] sm:$0xff]
  %v40 = vld [vmem:[%s1 + $0x38] sm:$0xff]
  %v41 = vld [vmem:[%s1 + $0x40] sm:$0xff]
  %v42 = vld [vmem:[%s1 + $0x48] sm:$0xff]
  %v43 = vld [vmem:[%s1 + $0x50] sm:$0xff]
  %v44 = vld [vmem:[%s1 + $0x58] sm:$0xff]
  %v45 = vld [vmem:[%s1 + $0x60] sm:$0xff]
  %v46 = vld [vmem:[%s1 + $0x68] sm:$0xff]
  %v47 = vld [vmem:[%s1 + $0x70] sm:$0xff]
  %v48 = vld [vmem:[%s1 + $0x78] sm:$0xff]
  %vm49 = vcmask 64512
  %v51 = vsel %vm49, %v17, 0
  %53 = vmatprep.subr.mxu0 0.0
  %54 = vmatpush1.msra.mxu0 %v33
  %55 = vmatprep.subr.mxu0 0.0
  %56 = vmatpush1.msra.mxu0 0.0
  %57 = vmatprep.subr.mxu0 0.0
  %58 = vmatpush1.msra.mxu0 0.0
  %59 = vmatprep.subr.mxu0 0.0
  %60 = vmatpush1.msra.mxu0 0.0
  %61 = vmatprep.subr.mxu0 0.0
  %62 = vmatpush1.msra.mxu0 0.0
  %63 = vmatprep.subr.mxu0 0.0
  %64 = vmatpush1.msra.mxu0 0.0
  %65 = vmatprep.subr.mxu0 0.0
  %66 = vmatpush1.msra.mxu0 0.0
  %67 = vmatprep.subr.mxu0 0.0
  %68 = vmatpush1.msra.mxu0 0.0
  %69 = vmatprep.subr.mxu0 0.0
  %70 = vmatpush1.msra.mxu0 0.0
  %71 = vmatprep.subr.mxu0 0.0
  %72 = vmatpush1.msra.mxu0 0.0
  %73 = vmatprep.subr.mxu0 0.0
  %74 = vmatpush1.msra.mxu0 0.0
  %75 = vmatprep.subr.mxu0 0.0
  %76 = vmatpush1.msra.mxu0 0.0
  %77 = vmatprep.subr.mxu0 0.0
  %78 = vmatpush1.msra.mxu0 0.0
  %79 = vmatprep.subr.mxu0 0.0
  %80 = vmatpush1.msra.mxu0 0.0
  %81 = vmatprep.subr.mxu0 0.0
  %82 = vmatpush1.msra.mxu0 0.0
  %83 = vmatprep.subr.mxu0 0.0
  %84 = vmatpush1.msra.mxu0 0.0
  %85 = vmatprep.subr.mxu0 0.0
  %86 = vmatpush1.msra.mxu0 0.0
  %87 = vmatprep.subr.mxu0 0.0
  %88 = vmatpush1.msra.mxu0 0.0
  %89 = vmatprep.subr.mxu0 0.0
  %90 = vmatpush1.msra.mxu0 0.0
  %91 = vmatprep.subr.mxu0 0.0
  %92 = vmatpush1.msra.mxu0 0.0
  %93 = vmatprep.subr.mxu0 0.0
  %94 = vmatpush1.msra.mxu0 0.0
  %95 = vmatprep.subr.mxu0 0.0
  %96 = vmatpush1.msra.mxu0 0.0
  %97 = vmatprep.subr.mxu0 0.0
  %98 = vmatpush1.msra.mxu0 0.0
  %99 = vmatprep.subr.mxu0 0.0
  %100 = vmatpush1.msra.mxu0 0.0
  %101 = vmatprep.subr.mxu0 0.0
  %102 = vmatpush1.msra.mxu0 0.0
  %103 = vmatprep.subr.mxu0 0.0
  %104 = vmatpush1.msra.mxu0 0.0
  %105 = vmatprep.subr.mxu0 0.0
  %106 = vmatpush1.msra.mxu0 0.0
  %107 = vmatprep.subr.mxu0 0.0
  %108 = vmatpush1.msra.mxu0 0.0
  %109 = vmatprep.subr.mxu0 0.0
  %110 = vmatpush1.msra.mxu0 0.0
  %111 = vmatprep.subr.mxu0 0.0
  %112 = vmatpush1.msra.mxu0 0.0
  %113 = vmatprep.subr.mxu0 0.0
  %114 = vmatpush1.msra.mxu0 0.0
  %115 = vmatprep.subr.mxu0 0.0
  %116 = vmatpush1.msra.mxu0 0.0
  %117 = vmatprep.mubr.f32.mxu0 0.0
  %118 = vmatmul.mubr.f32.gmra.mrb[0].mxu0 %v51
  %v119 = vpop.f32.mrb[0].mxu0
  %v120 = vadd.f32 0.0, %v119
  %v121 = vpop.f32.mrb[0].mxu0
  %122 = vdwg.mxu0
  %v124 = vsel %vm49, %v18, 0
  %126 = vmatprep.subr.mxu0 0.0
  %127 = vmatpush1.msra.mxu0 %v34
  %128 = vmatprep.subr.mxu0 0.0
  %129 = vmatpush1.msra.mxu0 0.0
  %130 = vmatprep.subr.mxu0 0.0
  %131 = vmatpush1.msra.mxu0 0.0
  %132 = vmatprep.subr.mxu0 0.0
  %133 = vmatpush1.msra.mxu0 0.0
  %134 = vmatprep.subr.mxu0 0.0
  %135 = vmatpush1.msra.mxu0 0.0
  %136 = vmatprep.subr.mxu0 0.0
  %137 = vmatpush1.msra.mxu0 0.0
  %138 = vmatprep.subr.mxu0 0.0
  %139 = vmatpush1.msra.mxu0 0.0
  %140 = vmatprep.subr.mxu0 0.0
  %141 = vmatpush1.msra.mxu0 0.0
  %142 = vmatprep.subr.mxu0 0.0
  %143 = vmatpush1.msra.mxu0 0.0
  %144 = vmatprep.subr.mxu0 0.0
  %145 = vmatpush1.msra.mxu0 0.0
  %146 = vmatprep.subr.mxu0 0.0
  %147 = vmatpush1.msra.mxu0 0.0
  %148 = vmatprep.subr.mxu0 0.0
  %149 = vmatpush1.msra.mxu0 0.0
  %150 = vmatprep.subr.mxu0 0.0
  %151 = vmatpush1.msra.mxu0 0.0
  %152 = vmatprep.subr.mxu0 0.0
  %153 = vmatpush1.msra.mxu0 0.0
  %154 = vmatprep.subr.mxu0 0.0
  %155 = vmatpush1.msra.mxu0 0.0
  %156 = vmatprep.subr.mxu0 0.0
  %157 = vmatpush1.msra.mxu0 0.0
  %158 = vmatprep.subr.mxu0 0.0
  %159 = vmatpush1.msra.mxu0 0.0
  %160 = vmatprep.subr.mxu0 0.0
  %161 = vmatpush1.msra.mxu0 0.0
  %162 = vmatprep.subr.mxu0 0.0
  %163 = vmatpush1.msra.mxu0 0.0
  %164 = vmatprep.subr.mxu0 0.0
  %165 = vmatpush1.msra.mxu0 0.0
  %166 = vmatprep.subr.mxu0 0.0
  %167 = vmatpush1.msra.mxu0 0.0
  %168 = vmatprep.subr.mxu0 0.0
  %169 = vmatpush1.msra.mxu0 0.0
  %170 = vmatprep.subr.mxu0 0.0
  %171 = vmatpush1.msra.mxu0 0.0
  %172 = vmatprep.subr.mxu0 0.0
  %173 = vmatpush1.msra.mxu0 0.0
  %174 = vmatprep.subr.mxu0 0.0
  %175 = vmatpush1.msra.mxu0 0.0
  %176 = vmatprep.subr.mxu0 0.0
  %177 = vmatpush1.msra.mxu0 0.0
  %178 = vmatprep.subr.mxu0 0.0
  %179 = vmatpush1.msra.mxu0 0.0
  %180 = vmatprep.subr.mxu0 0.0
  %181 = vmatpush1.msra.mxu0 0.0
  %182 = vmatprep.subr.mxu0 0.0
  %183 = vmatpush1.msra.mxu0 0.0
  %184 = vmatprep.subr.mxu0 0.0
  %185 = vmatpush1.msra.mxu0 0.0
  %186 = vmatprep.subr.mxu0 0.0
  %187 = vmatpush1.msra.mxu0 0.0
  %188 = vmatprep.subr.mxu0 0.0
  %189 = vmatpush1.msra.mxu0 0.0
  %190 = vmatprep.mubr.f32.mxu0 0.0
  %191 = vmatmul.mubr.f32.gmra.mrb[0].mxu0 %v124
  %v192 = vpop.f32.mrb[0].mxu0
  %v193 = vadd.f32 0.0, %v192
  %v194 = vpop.f32.mrb[0].mxu0
  %195 = vdwg.mxu0
  %v197 = vsel %vm49, %v19, 0
  %199 = vmatprep.subr.mxu0 0.0
  %200 = vmatpush1.msra.mxu0 %v35
  %201 = vmatprep.subr.mxu0 0.0
  %202 = vmatpush1.msra.mxu0 0.0
  %203 = vmatprep.subr.mxu0 0.0
  %204 = vmatpush1.msra.mxu0 0.0
  %205 = vmatprep.subr.mxu0 0.0
  %206 = vmatpush1.msra.mxu0 0.0
  %207 = vmatprep.subr.mxu0 0.0
  %208 = vmatpush1.msra.mxu0 0.0
  %209 = vmatprep.subr.mxu0 0.0
  %210 = vmatpush1.msra.mxu0 0.0
  %211 = vmatprep.subr.mxu0 0.0
  %212 = vmatpush1.msra.mxu0 0.0
  %213 = vmatprep.subr.mxu0 0.0
  %214 = vmatpush1.msra.mxu0 0.0
  %215 = vmatprep.subr.mxu0 0.0
  %216 = vmatpush1.msra.mxu0 0.0
  %217 = vmatprep.subr.mxu0 0.0
  %218 = vmatpush1.msra.mxu0 0.0
  %219 = vmatprep.subr.mxu0 0.0
  %220 = vmatpush1.msra.mxu0 0.0
  %221 = vmatprep.subr.mxu0 0.0
  %222 = vmatpush1.msra.mxu0 0.0
  %223 = vmatprep.subr.mxu0 0.0
  %224 = vmatpush1.msra.mxu0 0.0
  %225 = vmatprep.subr.mxu0 0.0
  %226 = vmatpush1.msra.mxu0 0.0
  %227 = vmatprep.subr.mxu0 0.0
  %228 = vmatpush1.msra.mxu0 0.0
  %229 = vmatprep.subr.mxu0 0.0
  %230 = vmatpush1.msra.mxu0 0.0
  %231 = vmatprep.subr.mxu0 0.0
  %232 = vmatpush1.msra.mxu0 0.0
  %233 = vmatprep.subr.mxu0 0.0
  %234 = vmatpush1.msra.mxu0 0.0
  %235 = vmatprep.subr.mxu0 0.0
  %236 = vmatpush1.msra.mxu0 0.0
  %237 = vmatprep.subr.mxu0 0.0
  %238 = vmatpush1.msra.mxu0 0.0
  %239 = vmatprep.subr.mxu0 0.0
  %240 = vmatpush1.msra.mxu0 0.0
  %241 = vmatprep.subr.mxu0 0.0
  %242 = vmatpush1.msra.mxu0 0.0
  %243 = vmatprep.subr.mxu0 0.0
  %244 = vmatpush1.msra.mxu0 0.0
  %245 = vmatprep.subr.mxu0 0.0
  %246 = vmatpush1.msra.mxu0 0.0
  %247 = vmatprep.subr.mxu0 0.0
  %248 = vmatpush1.msra.mxu0 0.0
  %249 = vmatprep.subr.mxu0 0.0
  %250 = vmatpush1.msra.mxu0 0.0
  %251 = vmatprep.subr.mxu0 0.0
  %252 = vmatpush1.msra.mxu0 0.0
  %253 = vmatprep.subr.mxu0 0.0
  %254 = vmatpush1.msra.mxu0 0.0
  %255 = vmatprep.subr.mxu0 0.0
  %256 = vmatpush1.msra.mxu0 0.0
  %257 = vmatprep.subr.mxu0 0.0
  %258 = vmatpush1.msra.mxu0 0.0
  %259 = vmatprep.subr.mxu0 0.0
  %260 = vmatpush1.msra.mxu0 0.0
  %261 = vmatprep.subr.mxu0 0.0
  %262 = vmatpush1.msra.mxu0 0.0
  %263 = vmatprep.mubr.f32.mxu0 0.0
  %264 = vmatmul.mubr.f32.gmra.mrb[0].mxu0 %v197
  %v265 = vpop.f32.mrb[0].mxu0
  %v266 = vadd.f32 0.0, %v265
  %v267 = vpop.f32.mrb[0].mxu0
  %268 = vdwg.mxu0
  %v270 = vsel %vm49, %v20, 0
  %272 = vmatprep.subr.mxu0 0.0
  %273 = vmatpush1.msra.mxu0 %v36
  %274 = vmatprep.subr.mxu0 0.0
  %275 = vmatpush1.msra.mxu0 0.0
  %276 = vmatprep.subr.mxu0 0.0
  %277 = vmatpush1.msra.mxu0 0.0
  %278 = vmatprep.subr.mxu0 0.0
  %279 = vmatpush1.msra.mxu0 0.0
  %280 = vmatprep.subr.mxu0 0.0
  %281 = vmatpush1.msra.mxu0 0.0
  %282 = vmatprep.subr.mxu0 0.0
  %283 = vmatpush1.msra.mxu0 0.0
  %284 = vmatprep.subr.mxu0 0.0
  %285 = vmatpush1.msra.mxu0 0.0
  %286 = vmatprep.subr.mxu0 0.0
  %287 = vmatpush1.msra.mxu0 0.0
  %288 = vmatprep.subr.mxu0 0.0
  %289 = vmatpush1.msra.mxu0 0.0
  %290 = vmatprep.subr.mxu0 0.0
  %291 = vmatpush1.msra.mxu0 0.0
  %292 = vmatprep.subr.mxu0 0.0
  %293 = vmatpush1.msra.mxu0 0.0
  %294 = vmatprep.subr.mxu0 0.0
  %295 = vmatpush1.msra.mxu0 0.0
  %296 = vmatprep.subr.mxu0 0.0
  %297 = vmatpush1.msra.mxu0 0.0
  %298 = vmatprep.subr.mxu0 0.0
  %299 = vmatpush1.msra.mxu0 0.0
  %300 = vmatprep.subr.mxu0 0.0
  %301 = vmatpush1.msra.mxu0 0.0
  %302 = vmatprep.subr.mxu0 0.0
  %303 = vmatpush1.msra.mxu0 0.0
  %304 = vmatprep.subr.mxu0 0.0
  %305 = vmatpush1.msra.mxu0 0.0
  %306 = vmatprep.subr.mxu0 0.0
  %307 = vmatpush1.msra.mxu0 0.0
  %308 = vmatprep.subr.mxu0 0.0
  %309 = vmatpush1.msra.mxu0 0.0
  %310 = vmatprep.subr.mxu0 0.0
  %311 = vmatpush1.msra.mxu0 0.0
  %312 = vmatprep.subr.mxu0 0.0
  %313 = vmatpush1.msra.mxu0 0.0
  %314 = vmatprep.subr.mxu0 0.0
  %315 = vmatpush1.msra.mxu0 0.0
  %316 = vmatprep.subr.mxu0 0.0
  %317 = vmatpush1.msra.mxu0 0.0
  %318 = vmatprep.subr.mxu0 0.0
  %319 = vmatpush1.msra.mxu0 0.0
  %320 = vmatprep.subr.mxu0 0.0
  %321 = vmatpush1.msra.mxu0 0.0
  %322 = vmatprep.subr.mxu0 0.0
  %323 = vmatpush1.msra.mxu0 0.0
  %324 = vmatprep.subr.mxu0 0.0
  %325 = vmatpush1.msra.mxu0 0.0
  %326 = vmatprep.subr.mxu0 0.0
  %327 = vmatpush1.msra.mxu0 0.0
  %328 = vmatprep.subr.mxu0 0.0
  %329 = vmatpush1.msra.mxu0 0.0
  %330 = vmatprep.subr.mxu0 0.0
  %331 = vmatpush1.msra.mxu0 0.0
  %332 = vmatprep.subr.mxu0 0.0
  %333 = vmatpush1.msra.mxu0 0.0
  %334 = vmatprep.subr.mxu0 0.0
  %335 = vmatpush1.msra.mxu0 0.0
  %336 = vmatprep.mubr.f32.mxu0 0.0
  %337 = vmatmul.mubr.f32.gmra.mrb[0].mxu0 %v270
  %v338 = vpop.f32.mrb[0].mxu0
  %v339 = vadd.f32 0.0, %v338
  %v340 = vpop.f32.mrb[0].mxu0
  %341 = vdwg.mxu0
  %v343 = vsel %vm49, %v21, 0
  %345 = vmatprep.subr.mxu0 0.0
  %346 = vmatpush1.msra.mxu0 %v37
  %347 = vmatprep.subr.mxu0 0.0
  %348 = vmatpush1.msra.mxu0 0.0
  %349 = vmatprep.subr.mxu0 0.0
  %350 = vmatpush1.msra.mxu0 0.0
  %351 = vmatprep.subr.mxu0 0.0
  %352 = vmatpush1.msra.mxu0 0.0
  %353 = vmatprep.subr.mxu0 0.0
  %354 = vmatpush1.msra.mxu0 0.0
  %355 = vmatprep.subr.mxu0 0.0
  %356 = vmatpush1.msra.mxu0 0.0
  %357 = vmatprep.subr.mxu0 0.0
  %358 = vmatpush1.msra.mxu0 0.0
  %359 = vmatprep.subr.mxu0 0.0
  %360 = vmatpush1.msra.mxu0 0.0
  %361 = vmatprep.subr.mxu0 0.0
  %362 = vmatpush1.msra.mxu0 0.0
  %363 = vmatprep.subr.mxu0 0.0
  %364 = vmatpush1.msra.mxu0 0.0
  %365 = vmatprep.subr.mxu0 0.0
  %366 = vmatpush1.msra.mxu0 0.0
  %367 = vmatprep.subr.mxu0 0.0
  %368 = vmatpush1.msra.mxu0 0.0
  %369 = vmatprep.subr.mxu0 0.0
  %370 = vmatpush1.msra.mxu0 0.0
  %371 = vmatprep.subr.mxu0 0.0
  %372 = vmatpush1.msra.mxu0 0.0
  %373 = vmatprep.subr.mxu0 0.0
  %374 = vmatpush1.msra.mxu0 0.0
  %375 = vmatprep.subr.mxu0 0.0
  %376 = vmatpush1.msra.mxu0 0.0
  %377 = vmatprep.subr.mxu0 0.0
  %378 = vmatpush1.msra.mxu0 0.0
  %379 = vmatprep.subr.mxu0 0.0
  %380 = vmatpush1.msra.mxu0 0.0
  %381 = vmatprep.subr.mxu0 0.0
  %382 = vmatpush1.msra.mxu0 0.0
  %383 = vmatprep.subr.mxu0 0.0
  %384 = vmatpush1.msra.mxu0 0.0
  %385 = vmatprep.subr.mxu0 0.0
  %386 = vmatpush1.msra.mxu0 0.0
  %387 = vmatprep.subr.mxu0 0.0
  %388 = vmatpush1.msra.mxu0 0.0
  %389 = vmatprep.subr.mxu0 0.0
  %390 = vmatpush1.msra.mxu0 0.0
  %391 = vmatprep.subr.mxu0 0.0
  %392 = vmatpush1.msra.mxu0 0.0
  %393 = vmatprep.subr.mxu0 0.0
  %394 = vmatpush1.msra.mxu0 0.0
  %395 = vmatprep.subr.mxu0 0.0
  %396 = vmatpush1.msra.mxu0 0.0
  %397 = vmatprep.subr.mxu0 0.0
  %398 = vmatpush1.msra.mxu0 0.0
  %399 = vmatprep.subr.mxu0 0.0
  %400 = vmatpush1.msra.mxu0 0.0
  %401 = vmatprep.subr.mxu0 0.0
  %402 = vmatpush1.msra.mxu0 0.0
  %403 = vmatprep.subr.mxu0 0.0
  %404 = vmatpush1.msra.mxu0 0.0
  %405 = vmatprep.subr.mxu0 0.0
  %406 = vmatpush1.msra.mxu0 0.0
  %407 = vmatprep.subr.mxu0 0.0
  %408 = vmatpush1.msra.mxu0 0.0
  %409 = vmatprep.mubr.f32.mxu0 0.0
  %410 = vmatmul.mubr.f32.gmra.mrb[0].mxu0 %v343
  %v411 = vpop.f32.mrb[0].mxu0
  %v412 = vadd.f32 0.0, %v411
  %v413 = vpop.f32.mrb[0].mxu0
  %414 = vdwg.mxu0
  %v416 = vsel %vm49, %v22, 0
  %418 = vmatprep.subr.mxu0 0.0
  %419 = vmatpush1.msra.mxu0 %v38
  %420 = vmatprep.subr.mxu0 0.0
  %421 = vmatpush1.msra.mxu0 0.0
  %422 = vmatprep.subr.mxu0 0.0
  %423 = vmatpush1.msra.mxu0 0.0
  %424 = vmatprep.subr.mxu0 0.0
  %425 = vmatpush1.msra.mxu0 0.0
  %426 = vmatprep.subr.mxu0 0.0
  %427 = vmatpush1.msra.mxu0 0.0
  %428 = vmatprep.subr.mxu0 0.0
  %429 = vmatpush1.msra.mxu0 0.0
  %430 = vmatprep.subr.mxu0 0.0
  %431 = vmatpush1.msra.mxu0 0.0
  %432 = vmatprep.subr.mxu0 0.0
  %433 = vmatpush1.msra.mxu0 0.0
  %434 = vmatprep.subr.mxu0 0.0
  %435 = vmatpush1.msra.mxu0 0.0
  %436 = vmatprep.subr.mxu0 0.0
  %437 = vmatpush1.msra.mxu0 0.0
  %438 = vmatprep.subr.mxu0 0.0
  %439 = vmatpush1.msra.mxu0 0.0
  %440 = vmatprep.subr.mxu0 0.0
  %441 = vmatpush1.msra.mxu0 0.0
  %442 = vmatprep.subr.mxu0 0.0
  %443 = vmatpush1.msra.mxu0 0.0
  %444 = vmatprep.subr.mxu0 0.0
  %445 = vmatpush1.msra.mxu0 0.0
  %446 = vmatprep.subr.mxu0 0.0
  %447 = vmatpush1.msra.mxu0 0.0
  %448 = vmatprep.subr.mxu0 0.0
  %449 = vmatpush1.msra.mxu0 0.0
  %450 = vmatprep.subr.mxu0 0.0
  %451 = vmatpush1.msra.mxu0 0.0
  %452 = vmatprep.subr.mxu0 0.0
  %453 = vmatpush1.msra.mxu0 0.0
  %454 = vmatprep.subr.mxu0 0.0
  %455 = vmatpush1.msra.mxu0 0.0
  %456 = vmatprep.subr.mxu0 0.0
  %457 = vmatpush1.msra.mxu0 0.0
  %458 = vmatprep.subr.mxu0 0.0
  %459 = vmatpush1.msra.mxu0 0.0
  %460 = vmatprep.subr.mxu0 0.0
  %461 = vmatpush1.msra.mxu0 0.0
  %462 = vmatprep.subr.mxu0 0.0
  %463 = vmatpush1.msra.mxu0 0.0
  %464 = vmatprep.subr.mxu0 0.0
  %465 = vmatpush1.msra.mxu0 0.0
  %466 = vmatprep.subr.mxu0 0.0
  %467 = vmatpush1.msra.mxu0 0.0
  %468 = vmatprep.subr.mxu0 0.0
  %469 = vmatpush1.msra.mxu0 0.0
  %470 = vmatprep.subr.mxu0 0.0
  %471 = vmatpush1.msra.mxu0 0.0
  %472 = vmatprep.subr.mxu0 0.0
  %473 = vmatpush1.msra.mxu0 0.0
  %474 = vmatprep.subr.mxu0 0.0
  %475 = vmatpush1.msra.mxu0 0.0
  %476 = vmatprep.subr.mxu0 0.0
  %477 = vmatpush1.msra.mxu0 0.0
  %478 = vmatprep.subr.mxu0 0.0
  %479 = vmatpush1.msra.mxu0 0.0
  %480 = vmatprep.subr.mxu0 0.0
  %481 = vmatpush1.msra.mxu0 0.0
  %482 = vmatprep.mubr.f32.mxu0 0.0
  %483 = vmatmul.mubr.f32.gmra.mrb[0].mxu0 %v416
  %v484 = vpop.f32.mrb[0].mxu0
  %v485 = vadd.f32 0.0, %v484
  %v486 = vpop.f32.mrb[0].mxu0
  %487 = vdwg.mxu0
  %v489 = vsel %vm49, %v23, 0
  %491 = vmatprep.subr.mxu0 0.0
  %492 = vmatpush1.msra.mxu0 %v39
  %493 = vmatprep.subr.mxu0 0.0
  %494 = vmatpush1.msra.mxu0 0.0
  %495 = vmatprep.subr.mxu0 0.0
  %496 = vmatpush1.msra.mxu0 0.0
  %497 = vmatprep.subr.mxu0 0.0
  %498 = vmatpush1.msra.mxu0 0.0
  %499 = vmatprep.subr.mxu0 0.0
  %500 = vmatpush1.msra.mxu0 0.0
  %501 = vmatprep.subr.mxu0 0.0
  %502 = vmatpush1.msra.mxu0 0.0
  %503 = vmatprep.subr.mxu0 0.0
  %504 = vmatpush1.msra.mxu0 0.0
  %505 = vmatprep.subr.mxu0 0.0
  %506 = vmatpush1.msra.mxu0 0.0
  %507 = vmatprep.subr.mxu0 0.0
  %508 = vmatpush1.msra.mxu0 0.0
  %509 = vmatprep.subr.mxu0 0.0
  %510 = vmatpush1.msra.mxu0 0.0
  %511 = vmatprep.subr.mxu0 0.0
  %512 = vmatpush1.msra.mxu0 0.0
  %513 = vmatprep.subr.mxu0 0.0
  %514 = vmatpush1.msra.mxu0 0.0
  %515 = vmatprep.subr.mxu0 0.0
  %516 = vmatpush1.msra.mxu0 0.0
  %517 = vmatprep.subr.mxu0 0.0
  %518 = vmatpush1.msra.mxu0 0.0
  %519 = vmatprep.subr.mxu0 0.0
  %520 = vmatpush1.msra.mxu0 0.0
  %521 = vmatprep.subr.mxu0 0.0
  %522 = vmatpush1.msra.mxu0 0.0
  %523 = vmatprep.subr.mxu0 0.0
  %524 = vmatpush1.msra.mxu0 0.0
  %525 = vmatprep.subr.mxu0 0.0
  %526 = vmatpush1.msra.mxu0 0.0
  %527 = vmatprep.subr.mxu0 0.0
  %528 = vmatpush1.msra.mxu0 0.0
  %529 = vmatprep.subr.mxu0 0.0
  %530 = vmatpush1.msra.mxu0 0.0
  %531 = vmatprep.subr.mxu0 0.0
  %532 = vmatpush1.msra.mxu0 0.0
  %533 = vmatprep.subr.mxu0 0.0
  %534 = vmatpush1.msra.mxu0 0.0
  %535 = vmatprep.subr.mxu0 0.0
  %536 = vmatpush1.msra.mxu0 0.0
  %537 = vmatprep.subr.mxu0 0.0
  %538 = vmatpush1.msra.mxu0 0.0
  %539 = vmatprep.subr.mxu0 0.0
  %540 = vmatpush1.msra.mxu0 0.0
  %541 = vmatprep.subr.mxu0 0.0
  %542 = vmatpush1.msra.mxu0 0.0
  %543 = vmatprep.subr.mxu0 0.0
  %544 = vmatpush1.msra.mxu0 0.0
  %545 = vmatprep.subr.mxu0 0.0
  %546 = vmatpush1.msra.mxu0 0.0
  %547 = vmatprep.subr.mxu0 0.0
  %548 = vmatpush1.msra.mxu0 0.0
  %549 = vmatprep.subr.mxu0 0.0
  %550 = vmatpush1.msra.mxu0 0.0
  %551 = vmatprep.subr.mxu0 0.0
  %552 = vmatpush1.msra.mxu0 0.0
  %553 = vmatprep.subr.mxu0 0.0
  %554 = vmatpush1.msra.mxu0 0.0
  %555 = vmatprep.mubr.f32.mxu0 0.0
  %556 = vmatmul.mubr.f32.gmra.mrb[0].mxu0 %v489
  %v557 = vpop.f32.mrb[0].mxu0
  %v558 = vadd.f32 0.0, %v557
  %v559 = vpop.f32.mrb[0].mxu0
  %560 = vdwg.mxu0
  %v562 = vsel %vm49, %v24, 0
  %564 = vmatprep.subr.mxu0 0.0
  %565 = vmatpush1.msra.mxu0 %v40
  %566 = vmatprep.subr.mxu0 0.0
  %567 = vmatpush1.msra.mxu0 0.0
  %568 = vmatprep.subr.mxu0 0.0
  %569 = vmatpush1.msra.mxu0 0.0
  %570 = vmatprep.subr.mxu0 0.0
  %571 = vmatpush1.msra.mxu0 0.0
  %572 = vmatprep.subr.mxu0 0.0
  %573 = vmatpush1.msra.mxu0 0.0
  %574 = vmatprep.subr.mxu0 0.0
  %575 = vmatpush1.msra.mxu0 0.0
  %576 = vmatprep.subr.mxu0 0.0
  %577 = vmatpush1.msra.mxu0 0.0
  %578 = vmatprep.subr.mxu0 0.0
  %579 = vmatpush1.msra.mxu0 0.0
  %580 = vmatprep.subr.mxu0 0.0
  %581 = vmatpush1.msra.mxu0 0.0
  %582 = vmatprep.subr.mxu0 0.0
  %583 = vmatpush1.msra.mxu0 0.0
  %584 = vmatprep.subr.mxu0 0.0
  %585 = vmatpush1.msra.mxu0 0.0
  %586 = vmatprep.subr.mxu0 0.0
  %587 = vmatpush1.msra.mxu0 0.0
  %588 = vmatprep.subr.mxu0 0.0
  %589 = vmatpush1.msra.mxu0 0.0
  %590 = vmatprep.subr.mxu0 0.0
  %591 = vmatpush1.msra.mxu0 0.0
  %592 = vmatprep.subr.mxu0 0.0
  %593 = vmatpush1.msra.mxu0 0.0
  %594 = vmatprep.subr.mxu0 0.0
  %595 = vmatpush1.msra.mxu0 0.0
  %596 = vmatprep.subr.mxu0 0.0
  %597 = vmatpush1.msra.mxu0 0.0
  %598 = vmatprep.subr.mxu0 0.0
  %599 = vmatpush1.msra.mxu0 0.0
  %600 = vmatprep.subr.mxu0 0.0
  %601 = vmatpush1.msra.mxu0 0.0
  %602 = vmatprep.subr.mxu0 0.0
  %603 = vmatpush1.msra.mxu0 0.0
  %604 = vmatprep.subr.mxu0 0.0
  %605 = vmatpush1.msra.mxu0 0.0
  %606 = vmatprep.subr.mxu0 0.0
  %607 = vmatpush1.msra.mxu0 0.0
  %608 = vmatprep.subr.mxu0 0.0
  %609 = vmatpush1.msra.mxu0 0.0
  %610 = vmatprep.subr.mxu0 0.0
  %611 = vmatpush1.msra.mxu0 0.0
  %612 = vmatprep.subr.mxu0 0.0
  %613 = vmatpush1.msra.mxu0 0.0
  %614 = vmatprep.subr.mxu0 0.0
  %615 = vmatpush1.msra.mxu0 0.0
  %616 = vmatprep.subr.mxu0 0.0
  %617 = vmatpush1.msra.mxu0 0.0
  %618 = vmatprep.subr.mxu0 0.0
  %619 = vmatpush1.msra.mxu0 0.0
  %620 = vmatprep.subr.mxu0 0.0
  %621 = vmatpush1.msra.mxu0 0.0
  %622 = vmatprep.subr.mxu0 0.0
  %623 = vmatpush1.msra.mxu0 0.0
  %624 = vmatprep.subr.mxu0 0.0
  %625 = vmatpush1.msra.mxu0 0.0
  %626 = vmatprep.subr.mxu0 0.0
  %627 = vmatpush1.msra.mxu0 0.0
  %628 = vmatprep.mubr.f32.mxu0 0.0
  %629 = vmatmul.mubr.f32.gmra.mrb[0].mxu0 %v562
  %v630 = vpop.f32.mrb[0].mxu0
  %v631 = vadd.f32 0.0, %v630
  %v632 = vpop.f32.mrb[0].mxu0
  %633 = vdwg.mxu0
  %v635 = vsel %vm49, %v25, 0
  %637 = vmatprep.subr.mxu0 0.0
  %638 = vmatpush1.msra.mxu0 %v41
  %639 = vmatprep.subr.mxu0 0.0
  %640 = vmatpush1.msra.mxu0 0.0
  %641 = vmatprep.subr.mxu0 0.0
  %642 = vmatpush1.msra.mxu0 0.0
  %643 = vmatprep.subr.mxu0 0.0
  %644 = vmatpush1.msra.mxu0 0.0
  %645 = vmatprep.subr.mxu0 0.0
  %646 = vmatpush1.msra.mxu0 0.0
  %647 = vmatprep.subr.mxu0 0.0
  %648 = vmatpush1.msra.mxu0 0.0
  %649 = vmatprep.subr.mxu0 0.0
  %650 = vmatpush1.msra.mxu0 0.0
  %651 = vmatprep.subr.mxu0 0.0
  %652 = vmatpush1.msra.mxu0 0.0
  %653 = vmatprep.subr.mxu0 0.0
  %654 = vmatpush1.msra.mxu0 0.0
  %655 = vmatprep.subr.mxu0 0.0
  %656 = vmatpush1.msra.mxu0 0.0
  %657 = vmatprep.subr.mxu0 0.0
  %658 = vmatpush1.msra.mxu0 0.0
  %659 = vmatprep.subr.mxu0 0.0
  %660 = vmatpush1.msra.mxu0 0.0
  %661 = vmatprep.subr.mxu0 0.0
  %662 = vmatpush1.msra.mxu0 0.0
  %663 = vmatprep.subr.mxu0 0.0
  %664 = vmatpush1.msra.mxu0 0.0
  %665 = vmatprep.subr.mxu0 0.0
  %666 = vmatpush1.msra.mxu0 0.0
  %667 = vmatprep.subr.mxu0 0.0
  %668 = vmatpush1.msra.mxu0 0.0
  %669 = vmatprep.subr.mxu0 0.0
  %670 = vmatpush1.msra.mxu0 0.0
  %671 = vmatprep.subr.mxu0 0.0
  %672 = vmatpush1.msra.mxu0 0.0
  %673 = vmatprep.subr.mxu0 0.0
  %674 = vmatpush1.msra.mxu0 0.0
  %675 = vmatprep.subr.mxu0 0.0
  %676 = vmatpush1.msra.mxu0 0.0
  %677 = vmatprep.subr.mxu0 0.0
  %678 = vmatpush1.msra.mxu0 0.0
  %679 = vmatprep.subr.mxu0 0.0
  %680 = vmatpush1.msra.mxu0 0.0
  %681 = vmatprep.subr.mxu0 0.0
  %682 = vmatpush1.msra.mxu0 0.0
  %683 = vmatprep.subr.mxu0 0.0
  %684 = vmatpush1.msra.mxu0 0.0
  %685 = vmatprep.subr.mxu0 0.0
  %686 = vmatpush1.msra.mxu0 0.0
  %687 = vmatprep.subr.mxu0 0.0
  %688 = vmatpush1.msra.mxu0 0.0
  %689 = vmatprep.subr.mxu0 0.0
  %690 = vmatpush1.msra.mxu0 0.0
  %691 = vmatprep.subr.mxu0 0.0
  %692 = vmatpush1.msra.mxu0 0.0
  %693 = vmatprep.subr.mxu0 0.0
  %694 = vmatpush1.msra.mxu0 0.0
  %695 = vmatprep.subr.mxu0 0.0
  %696 = vmatpush1.msra.mxu0 0.0
  %697 = vmatprep.subr.mxu0 0.0
  %698 = vmatpush1.msra.mxu0 0.0
  %699 = vmatprep.subr.mxu0 0.0
  %700 = vmatpush1.msra.mxu0 0.0
  %701 = vmatprep.mubr.f32.mxu0 0.0
  %702 = vmatmul.mubr.f32.gmra.mrb[0].mxu0 %v635
  %v703 = vpop.f32.mrb[0].mxu0
  %v704 = vadd.f32 0.0, %v703
  %v705 = vpop.f32.mrb[0].mxu0
  %706 = vdwg.mxu0
  %v708 = vsel %vm49, %v26, 0
  %710 = vmatprep.subr.mxu0 0.0
  %711 = vmatpush1.msra.mxu0 %v42
  %712 = vmatprep.subr.mxu0 0.0
  %713 = vmatpush1.msra.mxu0 0.0
  %714 = vmatprep.subr.mxu0 0.0
  %715 = vmatpush1.msra.mxu0 0.0
  %716 = vmatprep.subr.mxu0 0.0
  %717 = vmatpush1.msra.mxu0 0.0
  %718 = vmatprep.subr.mxu0 0.0
  %719 = vmatpush1.msra.mxu0 0.0
  %720 = vmatprep.subr.mxu0 0.0
  %721 = vmatpush1.msra.mxu0 0.0
  %722 = vmatprep.subr.mxu0 0.0
  %723 = vmatpush1.msra.mxu0 0.0
  %724 = vmatprep.subr.mxu0 0.0
  %725 = vmatpush1.msra.mxu0 0.0
  %726 = vmatprep.subr.mxu0 0.0
  %727 = vmatpush1.msra.mxu0 0.0
  %728 = vmatprep.subr.mxu0 0.0
  %729 = vmatpush1.msra.mxu0 0.0
  %730 = vmatprep.subr.mxu0 0.0
  %731 = vmatpush1.msra.mxu0 0.0
  %732 = vmatprep.subr.mxu0 0.0
  %733 = vmatpush1.msra.mxu0 0.0
  %734 = vmatprep.subr.mxu0 0.0
  %735 = vmatpush1.msra.mxu0 0.0
  %736 = vmatprep.subr.mxu0 0.0
  %737 = vmatpush1.msra.mxu0 0.0
  %738 = vmatprep.subr.mxu0 0.0
  %739 = vmatpush1.msra.mxu0 0.0
  %740 = vmatprep.subr.mxu0 0.0
  %741 = vmatpush1.msra.mxu0 0.0
  %742 = vmatprep.subr.mxu0 0.0
  %743 = vmatpush1.msra.mxu0 0.0
  %744 = vmatprep.subr.mxu0 0.0
  %745 = vmatpush1.msra.mxu0 0.0
  %746 = vmatprep.subr.mxu0 0.0
  %747 = vmatpush1.msra.mxu0 0.0
  %748 = vmatprep.subr.mxu0 0.0
  %749 = vmatpush1.msra.mxu0 0.0
  %750 = vmatprep.subr.mxu0 0.0
  %751 = vmatpush1.msra.mxu0 0.0
  %752 = vmatprep.subr.mxu0 0.0
  %753 = vmatpush1.msra.mxu0 0.0
  %754 = vmatprep.subr.mxu0 0.0
  %755 = vmatpush1.msra.mxu0 0.0
  %756 = vmatprep.subr.mxu0 0.0
  %757 = vmatpush1.msra.mxu0 0.0
  %758 = vmatprep.subr.mxu0 0.0
  %759 = vmatpush1.msra.mxu0 0.0
  %760 = vmatprep.subr.mxu0 0.0
  %761 = vmatpush1.msra.mxu0 0.0
  %762 = vmatprep.subr.mxu0 0.0
  %763 = vmatpush1.msra.mxu0 0.0
  %764 = vmatprep.subr.mxu0 0.0
  %765 = vmatpush1.msra.mxu0 0.0
  %766 = vmatprep.subr.mxu0 0.0
  %767 = vmatpush1.msra.mxu0 0.0
  %768 = vmatprep.subr.mxu0 0.0
  %769 = vmatpush1.msra.mxu0 0.0
  %770 = vmatprep.subr.mxu0 0.0
  %771 = vmatpush1.msra.mxu0 0.0
  %772 = vmatprep.subr.mxu0 0.0
  %773 = vmatpush1.msra.mxu0 0.0
  %774 = vmatprep.mubr.f32.mxu0 0.0
  %775 = vmatmul.mubr.f32.gmra.mrb[0].mxu0 %v708
  %v776 = vpop.f32.mrb[0].mxu0
  %v777 = vadd.f32 0.0, %v776
  %v778 = vpop.f32.mrb[0].mxu0
  %779 = vdwg.mxu0
  %v781 = vsel %vm49, %v27, 0
  %783 = vmatprep.subr.mxu0 0.0
  %784 = vmatpush1.msra.mxu0 %v43
  %785 = vmatprep.subr.mxu0 0.0
  %786 = vmatpush1.msra.mxu0 0.0
  %787 = vmatprep.subr.mxu0 0.0
  %788 = vmatpush1.msra.mxu0 0.0
  %789 = vmatprep.subr.mxu0 0.0
  %790 = vmatpush1.msra.mxu0 0.0
  %791 = vmatprep.subr.mxu0 0.0
  %792 = vmatpush1.msra.mxu0 0.0
  %793 = vmatprep.subr.mxu0 0.0
  %794 = vmatpush1.msra.mxu0 0.0
  %795 = vmatprep.subr.mxu0 0.0
  %796 = vmatpush1.msra.mxu0 0.0
  %797 = vmatprep.subr.mxu0 0.0
  %798 = vmatpush1.msra.mxu0 0.0
  %799 = vmatprep.subr.mxu0 0.0
  %800 = vmatpush1.msra.mxu0 0.0
  %801 = vmatprep.subr.mxu0 0.0
  %802 = vmatpush1.msra.mxu0 0.0
  %803 = vmatprep.subr.mxu0 0.0
  %804 = vmatpush1.msra.mxu0 0.0
  %805 = vmatprep.subr.mxu0 0.0
  %806 = vmatpush1.msra.mxu0 0.0
  %807 = vmatprep.subr.mxu0 0.0
  %808 = vmatpush1.msra.mxu0 0.0
  %809 = vmatprep.subr.mxu0 0.0
  %810 = vmatpush1.msra.mxu0 0.0
  %811 = vmatprep.subr.mxu0 0.0
  %812 = vmatpush1.msra.mxu0 0.0
  %813 = vmatprep.subr.mxu0 0.0
  %814 = vmatpush1.msra.mxu0 0.0
  %815 = vmatprep.subr.mxu0 0.0
  %816 = vmatpush1.msra.mxu0 0.0
  %817 = vmatprep.subr.mxu0 0.0
  %818 = vmatpush1.msra.mxu0 0.0
  %819 = vmatprep.subr.mxu0 0.0
  %820 = vmatpush1.msra.mxu0 0.0
  %821 = vmatprep.subr.mxu0 0.0
  %822 = vmatpush1.msra.mxu0 0.0
  %823 = vmatprep.subr.mxu0 0.0
  %824 = vmatpush1.msra.mxu0 0.0
  %825 = vmatprep.subr.mxu0 0.0
  %826 = vmatpush1.msra.mxu0 0.0
  %827 = vmatprep.subr.mxu0 0.0
  %828 = vmatpush1.msra.mxu0 0.0
  %829 = vmatprep.subr.mxu0 0.0
  %830 = vmatpush1.msra.mxu0 0.0
  %831 = vmatprep.subr.mxu0 0.0
  %832 = vmatpush1.msra.mxu0 0.0
  %833 = vmatprep.subr.mxu0 0.0
  %834 = vmatpush1.msra.mxu0 0.0
  %835 = vmatprep.subr.mxu0 0.0
  %836 = vmatpush1.msra.mxu0 0.0
  %837 = vmatprep.subr.mxu0 0.0
  %838 = vmatpush1.msra.mxu0 0.0
  %839 = vmatprep.subr.mxu0 0.0
  %840 = vmatpush1.msra.mxu0 0.0
  %841 = vmatprep.subr.mxu0 0.0
  %842 = vmatpush1.msra.mxu0 0.0
  %843 = vmatprep.subr.mxu0 0.0
  %844 = vmatpush1.msra.mxu0 0.0
  %845 = vmatprep.subr.mxu0 0.0
  %846 = vmatpush1.msra.mxu0 0.0
  %847 = vmatprep.mubr.f32.mxu0 0.0
  %848 = vmatmul.mubr.f32.gmra.mrb[0].mxu0 %v781
  %v849 = vpop.f32.mrb[0].mxu0
  %v850 = vadd.f32 0.0, %v849
  %v851 = vpop.f32.mrb[0].mxu0
  %852 = vdwg.mxu0
  %v854 = vsel %vm49, %v28, 0
  %856 = vmatprep.subr.mxu0 0.0
  %857 = vmatpush1.msra.mxu0 %v44
  %858 = vmatprep.subr.mxu0 0.0
  %859 = vmatpush1.msra.mxu0 0.0
  %860 = vmatprep.subr.mxu0 0.0
  %861 = vmatpush1.msra.mxu0 0.0
  %862 = vmatprep.subr.mxu0 0.0
  %863 = vmatpush1.msra.mxu0 0.0
  %864 = vmatprep.subr.mxu0 0.0
  %865 = vmatpush1.msra.mxu0 0.0
  %866 = vmatprep.subr.mxu0 0.0
  %867 = vmatpush1.msra.mxu0 0.0
  %868 = vmatprep.subr.mxu0 0.0
  %869 = vmatpush1.msra.mxu0 0.0
  %870 = vmatprep.subr.mxu0 0.0
  %871 = vmatpush1.msra.mxu0 0.0
  %872 = vmatprep.subr.mxu0 0.0
  %873 = vmatpush1.msra.mxu0 0.0
  %874 = vmatprep.subr.mxu0 0.0
  %875 = vmatpush1.msra.mxu0 0.0
  %876 = vmatprep.subr.mxu0 0.0
  %877 = vmatpush1.msra.mxu0 0.0
  %878 = vmatprep.subr.mxu0 0.0
  %879 = vmatpush1.msra.mxu0 0.0
  %880 = vmatprep.subr.mxu0 0.0
  %881 = vmatpush1.msra.mxu0 0.0
  %882 = vmatprep.subr.mxu0 0.0
  %883 = vmatpush1.msra.mxu0 0.0
  %884 = vmatprep.subr.mxu0 0.0
  %885 = vmatpush1.msra.mxu0 0.0
  %886 = vmatprep.subr.mxu0 0.0
  %887 = vmatpush1.msra.mxu0 0.0
  %888 = vmatprep.subr.mxu0 0.0
  %889 = vmatpush1.msra.mxu0 0.0
  %890 = vmatprep.subr.mxu0 0.0
  %891 = vmatpush1.msra.mxu0 0.0
  %892 = vmatprep.subr.mxu0 0.0
  %893 = vmatpush1.msra.mxu0 0.0
  %894 = vmatprep.subr.mxu0 0.0
  %895 = vmatpush1.msra.mxu0 0.0
  %896 = vmatprep.subr.mxu0 0.0
  %897 = vmatpush1.msra.mxu0 0.0
  %898 = vmatprep.subr.mxu0 0.0
  %899 = vmatpush1.msra.mxu0 0.0
  %900 = vmatprep.subr.mxu0 0.0
  %901 = vmatpush1.msra.mxu0 0.0
  %902 = vmatprep.subr.mxu0 0.0
  %903 = vmatpush1.msra.mxu0 0.0
  %904 = vmatprep.subr.mxu0 0.0
  %905 = vmatpush1.msra.mxu0 0.0
  %906 = vmatprep.subr.mxu0 0.0
  %907 = vmatpush1.msra.mxu0 0.0
  %908 = vmatprep.subr.mxu0 0.0
  %909 = vmatpush1.msra.mxu0 0.0
  %910 = vmatprep.subr.mxu0 0.0
  %911 = vmatpush1.msra.mxu0 0.0
  %912 = vmatprep.subr.mxu0 0.0
  %913 = vmatpush1.msra.mxu0 0.0
  %914 = vmatprep.subr.mxu0 0.0
  %915 = vmatpush1.msra.mxu0 0.0
  %916 = vmatprep.subr.mxu0 0.0
  %917 = vmatpush1.msra.mxu0 0.0
  %918 = vmatprep.subr.mxu0 0.0
  %919 = vmatpush1.msra.mxu0 0.0
  %920 = vmatprep.mubr.f32.mxu0 0.0
  %921 = vmatmul.mubr.f32.gmra.mrb[0].mxu0 %v854
  %v922 = vpop.f32.mrb[0].mxu0
  %v923 = vadd.f32 0.0, %v922
  %v924 = vpop.f32.mrb[0].mxu0
  %925 = vdwg.mxu0
  %v927 = vsel %vm49, %v29, 0
  %929 = vmatprep.subr.mxu0 0.0
  %930 = vmatpush1.msra.mxu0 %v45
  %931 = vmatprep.subr.mxu0 0.0
  %932 = vmatpush1.msra.mxu0 0.0
  %933 = vmatprep.subr.mxu0 0.0
  %934 = vmatpush1.msra.mxu0 0.0
  %935 = vmatprep.subr.mxu0 0.0
  %936 = vmatpush1.msra.mxu0 0.0
  %937 = vmatprep.subr.mxu0 0.0
  %938 = vmatpush1.msra.mxu0 0.0
  %939 = vmatprep.subr.mxu0 0.0
  %940 = vmatpush1.msra.mxu0 0.0
  %941 = vmatprep.subr.mxu0 0.0
  %942 = vmatpush1.msra.mxu0 0.0
  %943 = vmatprep.subr.mxu0 0.0
  %944 = vmatpush1.msra.mxu0 0.0
  %945 = vmatprep.subr.mxu0 0.0
  %946 = vmatpush1.msra.mxu0 0.0
  %947 = vmatprep.subr.mxu0 0.0
  %948 = vmatpush1.msra.mxu0 0.0
  %949 = vmatprep.subr.mxu0 0.0
  %950 = vmatpush1.msra.mxu0 0.0
  %951 = vmatprep.subr.mxu0 0.0
  %952 = vmatpush1.msra.mxu0 0.0
  %953 = vmatprep.subr.mxu0 0.0
  %954 = vmatpush1.msra.mxu0 0.0
  %955 = vmatprep.subr.mxu0 0.0
  %956 = vmatpush1.msra.mxu0 0.0
  %957 = vmatprep.subr.mxu0 0.0
  %958 = vmatpush1.msra.mxu0 0.0
  %959 = vmatprep.subr.mxu0 0.0
  %960 = vmatpush1.msra.mxu0 0.0
  %961 = vmatprep.subr.mxu0 0.0
  %962 = vmatpush1.msra.mxu0 0.0
  %963 = vmatprep.subr.mxu0 0.0
  %964 = vmatpush1.msra.mxu0 0.0
  %965 = vmatprep.subr.mxu0 0.0
  %966 = vmatpush1.msra.mxu0 0.0
  %967 = vmatprep.subr.mxu0 0.0
  %968 = vmatpush1.msra.mxu0 0.0
  %969 = vmatprep.subr.mxu0 0.0
  %970 = vmatpush1.msra.mxu0 0.0
  %971 = vmatprep.subr.mxu0 0.0
  %972 = vmatpush1.msra.mxu0 0.0
  %973 = vmatprep.subr.mxu0 0.0
  %974 = vmatpush1.msra.mxu0 0.0
  %975 = vmatprep.subr.mxu0 0.0
  %976 = vmatpush1.msra.mxu0 0.0
  %977 = vmatprep.subr.mxu0 0.0
  %978 = vmatpush1.msra.mxu0 0.0
  %979 = vmatprep.subr.mxu0 0.0
  %980 = vmatpush1.msra.mxu0 0.0
  %981 = vmatprep.subr.mxu0 0.0
  %982 = vmatpush1.msra.mxu0 0.0
  %983 = vmatprep.subr.mxu0 0.0
  %984 = vmatpush1.msra.mxu0 0.0
  %985 = vmatprep.subr.mxu0 0.0
  %986 = vmatpush1.msra.mxu0 0.0
  %987 = vmatprep.subr.mxu0 0.0
  %988 = vmatpush1.msra.mxu0 0.0
  %989 = vmatprep.subr.mxu0 0.0
  %990 = vmatpush1.msra.mxu0 0.0
  %991 = vmatprep.subr.mxu0 0.0
  %992 = vmatpush1.msra.mxu0 0.0
  %993 = vmatprep.mubr.f32.mxu0 0.0
  %994 = vmatmul.mubr.f32.gmra.mrb[0].mxu0 %v927
  %v995 = vpop.f32.mrb[0].mxu0
  %v996 = vadd.f32 0.0, %v995
  %v997 = vpop.f32.mrb[0].mxu0
  %998 = vdwg.mxu0
  %v1000 = vsel %vm49, %v30, 0
  %1002 = vmatprep.subr.mxu0 0.0
  %1003 = vmatpush1.msra.mxu0 %v46
  %1004 = vmatprep.subr.mxu0 0.0
  %1005 = vmatpush1.msra.mxu0 0.0
  %1006 = vmatprep.subr.mxu0 0.0
  %1007 = vmatpush1.msra.mxu0 0.0
  %1008 = vmatprep.subr.mxu0 0.0
  %1009 = vmatpush1.msra.mxu0 0.0
  %1010 = vmatprep.subr.mxu0 0.0
  %1011 = vmatpush1.msra.mxu0 0.0
  %1012 = vmatprep.subr.mxu0 0.0
  %1013 = vmatpush1.msra.mxu0 0.0
  %1014 = vmatprep.subr.mxu0 0.0
  %1015 = vmatpush1.msra.mxu0 0.0
  %1016 = vmatprep.subr.mxu0 0.0
  %1017 = vmatpush1.msra.mxu0 0.0
  %1018 = vmatprep.subr.mxu0 0.0
  %1019 = vmatpush1.msra.mxu0 0.0
  %1020 = vmatprep.subr.mxu0 0.0
  %1021 = vmatpush1.msra.mxu0 0.0
  %1022 = vmatprep.subr.mxu0 0.0
  %1023 = vmatpush1.msra.mxu0 0.0
  %1024 = vmatprep.subr.mxu0 0.0
  %1025 = vmatpush1.msra.mxu0 0.0
  %1026 = vmatprep.subr.mxu0 0.0
  %1027 = vmatpush1.msra.mxu0 0.0
  %1028 = vmatprep.subr.mxu0 0.0
  %1029 = vmatpush1.msra.mxu0 0.0
  %1030 = vmatprep.subr.mxu0 0.0
  %1031 = vmatpush1.msra.mxu0 0.0
  %1032 = vmatprep.subr.mxu0 0.0
  %1033 = vmatpush1.msra.mxu0 0.0
  %1034 = vmatprep.subr.mxu0 0.0
  %1035 = vmatpush1.msra.mxu0 0.0
  %1036 = vmatprep.subr.mxu0 0.0
  %1037 = vmatpush1.msra.mxu0 0.0
  %1038 = vmatprep.subr.mxu0 0.0
  %1039 = vmatpush1.msra.mxu0 0.0
  %1040 = vmatprep.subr.mxu0 0.0
  %1041 = vmatpush1.msra.mxu0 0.0
  %1042 = vmatprep.subr.mxu0 0.0
  %1043 = vmatpush1.msra.mxu0 0.0
  %1044 = vmatprep.subr.mxu0 0.0
  %1045 = vmatpush1.msra.mxu0 0.0
  %1046 = vmatprep.subr.mxu0 0.0
  %1047 = vmatpush1.msra.mxu0 0.0
  %1048 = vmatprep.subr.mxu0 0.0
  %1049 = vmatpush1.msra.mxu0 0.0
  %1050 = vmatprep.subr.mxu0 0.0
  %1051 = vmatpush1.msra.mxu0 0.0
  %1052 = vmatprep.subr.mxu0 0.0
  %1053 = vmatpush1.msra.mxu0 0.0
  %1054 = vmatprep.subr.mxu0 0.0
  %1055 = vmatpush1.msra.mxu0 0.0
  %1056 = vmatprep.subr.mxu0 0.0
  %1057 = vmatpush1.msra.mxu0 0.0
  %1058 = vmatprep.subr.mxu0 0.0
  %1059 = vmatpush1.msra.mxu0 0.0
  %1060 = vmatprep.subr.mxu0 0.0
  %1061 = vmatpush1.msra.mxu0 0.0
  %1062 = vmatprep.subr.mxu0 0.0
  %1063 = vmatpush1.msra.mxu0 0.0
  %1064 = vmatprep.subr.mxu0 0.0
  %1065 = vmatpush1.msra.mxu0 0.0
  %1066 = vmatprep.mubr.f32.mxu0 0.0
  %1067 = vmatmul.mubr.f32.gmra.mrb[0].mxu0 %v1000
  %v1068 = vpop.f32.mrb[0].mxu0
  %v1069 = vadd.f32 0.0, %v1068
  %v1070 = vpop.f32.mrb[0].mxu0
  %1071 = vdwg.mxu0
  %v1073 = vsel %vm49, %v31, 0
  %1075 = vmatprep.subr.mxu0 0.0
  %1076 = vmatpush1.msra.mxu0 %v47
  %1077 = vmatprep.subr.mxu0 0.0
  %1078 = vmatpush1.msra.mxu0 0.0
  %1079 = vmatprep.subr.mxu0 0.0
  %1080 = vmatpush1.msra.mxu0 0.0
  %1081 = vmatprep.subr.mxu0 0.0
  %1082 = vmatpush1.msra.mxu0 0.0
  %1083 = vmatprep.subr.mxu0 0.0
  %1084 = vmatpush1.msra.mxu0 0.0
  %1085 = vmatprep.subr.mxu0 0.0
  %1086 = vmatpush1.msra.mxu0 0.0
  %1087 = vmatprep.subr.mxu0 0.0
  %1088 = vmatpush1.msra.mxu0 0.0
  %1089 = vmatprep.subr.mxu0 0.0
  %1090 = vmatpush1.msra.mxu0 0.0
  %1091 = vmatprep.subr.mxu0 0.0
  %1092 = vmatpush1.msra.mxu0 0.0
  %1093 = vmatprep.subr.mxu0 0.0
  %1094 = vmatpush1.msra.mxu0 0.0
  %1095 = vmatprep.subr.mxu0 0.0
  %1096 = vmatpush1.msra.mxu0 0.0
  %1097 = vmatprep.subr.mxu0 0.0
  %1098 = vmatpush1.msra.mxu0 0.0
  %1099 = vmatprep.subr.mxu0 0.0
  %1100 = vmatpush1.msra.mxu0 0.0
  %1101 = vmatprep.subr.mxu0 0.0
  %1102 = vmatpush1.msra.mxu0 0.0
  %1103 = vmatprep.subr.mxu0 0.0
  %1104 = vmatpush1.msra.mxu0 0.0
  %1105 = vmatprep.subr.mxu0 0.0
  %1106 = vmatpush1.msra.mxu0 0.0
  %1107 = vmatprep.subr.mxu0 0.0
  %1108 = vmatpush1.msra.mxu0 0.0
  %1109 = vmatprep.subr.mxu0 0.0
  %1110 = vmatpush1.msra.mxu0 0.0
  %1111 = vmatprep.subr.mxu0 0.0
  %1112 = vmatpush1.msra.mxu0 0.0
  %1113 = vmatprep.subr.mxu0 0.0
  %1114 = vmatpush1.msra.mxu0 0.0
  %1115 = vmatprep.subr.mxu0 0.0
  %1116 = vmatpush1.msra.mxu0 0.0
  %1117 = vmatprep.subr.mxu0 0.0
  %1118 = vmatpush1.msra.mxu0 0.0
  %1119 = vmatprep.subr.mxu0 0.0
  %1120 = vmatpush1.msra.mxu0 0.0
  %1121 = vmatprep.subr.mxu0 0.0
  %1122 = vmatpush1.msra.mxu0 0.0
  %1123 = vmatprep.subr.mxu0 0.0
  %1124 = vmatpush1.msra.mxu0 0.0
  %1125 = vmatprep.subr.mxu0 0.0
  %1126 = vmatpush1.msra.mxu0 0.0
  %1127 = vmatprep.subr.mxu0 0.0
  %1128 = vmatpush1.msra.mxu0 0.0
  %1129 = vmatprep.subr.mxu0 0.0
  %1130 = vmatpush1.msra.mxu0 0.0
  %1131 = vmatprep.subr.mxu0 0.0
  %1132 = vmatpush1.msra.mxu0 0.0
  %1133 = vmatprep.subr.mxu0 0.0
  %1134 = vmatpush1.msra.mxu0 0.0
  %1135 = vmatprep.subr.mxu0 0.0
  %1136 = vmatpush1.msra.mxu0 0.0
  %1137 = vmatprep.subr.mxu0 0.0
  %1138 = vmatpush1.msra.mxu0 0.0
  %1139 = vmatprep.mubr.f32.mxu0 0.0
  %1140 = vmatmul.mubr.f32.gmra.mrb[0].mxu0 %v1073
  %v1141 = vpop.f32.mrb[0].mxu0
  %v1142 = vadd.f32 0.0, %v1141
  %v1143 = vpop.f32.mrb[0].mxu0
  %1144 = vdwg.mxu0
  %v1146 = vsel %vm49, %v32, 0
  %1148 = vmatprep.subr.mxu0 0.0
  %1149 = vmatpush1.msra.mxu0 %v48
  %1150 = vmatprep.subr.mxu0 0.0
  %1151 = vmatpush1.msra.mxu0 0.0
  %1152 = vmatprep.subr.mxu0 0.0
  %1153 = vmatpush1.msra.mxu0 0.0
  %1154 = vmatprep.subr.mxu0 0.0
  %1155 = vmatpush1.msra.mxu0 0.0
  %1156 = vmatprep.subr.mxu0 0.0
  %1157 = vmatpush1.msra.mxu0 0.0
  %1158 = vmatprep.subr.mxu0 0.0
  %1159 = vmatpush1.msra.mxu0 0.0
  %1160 = vmatprep.subr.mxu0 0.0
  %1161 = vmatpush1.msra.mxu0 0.0
  %1162 = vmatprep.subr.mxu0 0.0
  %1163 = vmatpush1.msra.mxu0 0.0
  %1164 = vmatprep.subr.mxu0 0.0
  %1165 = vmatpush1.msra.mxu0 0.0
  %1166 = vmatprep.subr.mxu0 0.0
  %1167 = vmatpush1.msra.mxu0 0.0
  %1168 = vmatprep.subr.mxu0 0.0
  %1169 = vmatpush1.msra.mxu0 0.0
  %1170 = vmatprep.subr.mxu0 0.0
  %1171 = vmatpush1.msra.mxu0 0.0
  %1172 = vmatprep.subr.mxu0 0.0
  %1173 = vmatpush1.msra.mxu0 0.0
  %1174 = vmatprep.subr.mxu0 0.0
  %1175 = vmatpush1.msra.mxu0 0.0
  %1176 = vmatprep.subr.mxu0 0.0
  %1177 = vmatpush1.msra.mxu0 0.0
  %1178 = vmatprep.subr.mxu0 0.0
  %1179 = vmatpush1.msra.mxu0 0.0
  %1180 = vmatprep.subr.mxu0 0.0
  %1181 = vmatpush1.msra.mxu0 0.0
  %1182 = vmatprep.subr.mxu0 0.0
  %1183 = vmatpush1.msra.mxu0 0.0
  %1184 = vmatprep.subr.mxu0 0.0
  %1185 = vmatpush1.msra.mxu0 0.0
  %1186 = vmatprep.subr.mxu0 0.0
  %1187 = vmatpush1.msra.mxu0 0.0
  %1188 = vmatprep.subr.mxu0 0.0
  %1189 = vmatpush1.msra.mxu0 0.0
  %1190 = vmatprep.subr.mxu0 0.0
  %1191 = vmatpush1.msra.mxu0 0.0
  %1192 = vmatprep.subr.mxu0 0.0
  %1193 = vmatpush1.msra.mxu0 0.0
  %1194 = vmatprep.subr.mxu0 0.0
  %1195 = vmatpush1.msra.mxu0 0.0
  %1196 = vmatprep.subr.mxu0 0.0
  %1197 = vmatpush1.msra.mxu0 0.0
  %1198 = vmatprep.subr.mxu0 0.0
  %1199 = vmatpush1.msra.mxu0 0.0
  %1200 = vmatprep.subr.mxu0 0.0
  %1201 = vmatpush1.msra.mxu0 0.0
  %1202 = vmatprep.subr.mxu0 0.0
  %1203 = vmatpush1.msra.mxu0 0.0
  %1204 = vmatprep.subr.mxu0 0.0
  %1205 = vmatpush1.msra.mxu0 0.0
  %1206 = vmatprep.subr.mxu0 0.0
  %1207 = vmatpush1.msra.mxu0 0.0
  %1208 = vmatprep.subr.mxu0 0.0
  %1209 = vmatpush1.msra.mxu0 0.0
  %1210 = vmatprep.subr.mxu0 0.0
  %1211 = vmatpush1.msra.mxu0 0.0
  %1212 = vmatprep.mubr.f32.mxu0 0.0
  %1213 = vmatmul.mubr.f32.gmra.mrb[0].mxu0 %v1146
  %v1214 = vpop.f32.mrb[0].mxu0
  %v1215 = vadd.f32 0.0, %v1214
  %v1216 = vpop.f32.mrb[0].mxu0
  %1217 = vdwg.mxu0
  %v1218 = vld [vmem:[%s2] sm:$0xff]
  %v1219 = vld [vmem:[%s2 + $0x8] sm:$0xff]
  %v1220 = vld [vmem:[%s2 + $0x10] sm:$0xff]
  %v1221 = vld [vmem:[%s2 + $0x18] sm:$0xff]
  %v1222 = vld [vmem:[%s2 + $0x20] sm:$0xff]
  %v1223 = vld [vmem:[%s2 + $0x28] sm:$0xff]
  %v1224 = vld [vmem:[%s2 + $0x30] sm:$0xff]
  %v1225 = vld [vmem:[%s2 + $0x38] sm:$0xff]
  %v1226 = vld [vmem:[%s3] sm:$0xff]
  %v1227 = vld [vmem:[%s3 + $0x8] sm:$0xff]
  %v1228 = vld [vmem:[%s3 + $0x10] sm:$0xff]
  %v1229 = vld [vmem:[%s3 + $0x18] sm:$0xff]
  %v1230 = vld [vmem:[%s3 + $0x20] sm:$0xff]
  %v1231 = vld [vmem:[%s3 + $0x28] sm:$0xff]
  %v1232 = vld [vmem:[%s3 + $0x30] sm:$0xff]
  %v1233 = vld [vmem:[%s3 + $0x38] sm:$0xff]
  %v1234 = vmul.f32 %v120, 0.0625
  %v1235 = vmul.f32 %v193, 0.0625
  %v1236 = vmul.f32 %v266, 0.0625
  %v1237 = vmul.f32 %v339, 0.0625
  %v1238 = vmul.f32 %v412, 0.0625
  %v1239 = vmul.f32 %v485, 0.0625
  %v1240 = vmul.f32 %v558, 0.0625
  %v1241 = vmul.f32 %v631, 0.0625
  %v1242 = vmul.f32 %v704, 0.0625
  %v1243 = vmul.f32 %v777, 0.0625
  %v1244 = vmul.f32 %v850, 0.0625
  %v1245 = vmul.f32 %v923, 0.0625
  %v1246 = vmul.f32 %v996, 0.0625
  %v1247 = vmul.f32 %v1069, 0.0625
  %v1248 = vmul.f32 %v1142, 0.0625
  %v1249 = vmul.f32 %v1215, 0.0625
  %vm1250 = vcmask 517120
  %v1251 = vsel %vm1250, %v1234, 0.0
  %v1252 = vsel %vm1250, %v1235, 0.0
  %v1253 = vadd.f32 %v1251, %v1252
  %v1254 = vsel %vm1250, %v1236, 0.0
  %v1255 = vadd.f32 %v1253, %v1254
  %v1256 = vsel %vm1250, %v1237, 0.0
  %v1257 = vadd.f32 %v1255, %v1256
  %v1258 = vsel %vm1250, %v1238, 0.0
  %v1259 = vadd.f32 %v1257, %v1258
  %v1260 = vsel %vm1250, %v1239, 0.0
  %v1261 = vadd.f32 %v1259, %v1260
  %v1262 = vsel %vm1250, %v1240, 0.0
  %v1263 = vadd.f32 %v1261, %v1262
  %v1264 = vsel %vm1250, %v1241, 0.0
  %v1265 = vadd.f32 %v1263, %v1264
  %v1266 = vsel %vm1250, %v1242, 0.0
  %v1267 = vadd.f32 %v1265, %v1266
  %v1268 = vsel %vm1250, %v1243, 0.0
  %v1269 = vadd.f32 %v1267, %v1268
  %v1270 = vsel %vm1250, %v1244, 0.0
  %v1271 = vadd.f32 %v1269, %v1270
  %v1272 = vsel %vm1250, %v1245, 0.0
  %v1273 = vadd.f32 %v1271, %v1272
  %v1274 = vsel %vm1250, %v1246, 0.0
  %v1275 = vadd.f32 %v1273, %v1274
  %v1276 = vsel %vm1250, %v1247, 0.0
  %v1277 = vadd.f32 %v1275, %v1276
  %v1278 = vsel %vm1250, %v1248, 0.0
  %v1279 = vadd.f32 %v1277, %v1278
  %v1280 = vsel %vm1250, %v1249, 0.0
  %v1281 = vadd.f32 %v1279, %v1280
  %v1282 = vmul.f32 %v1281, %v1281
  %vm1283 = vcmask 523264
  %v1285 = vsel %vm1283, %v1282, 0
  %1287 = vmatprep.subr.mxu0 0.0
  %1288 = vmatpush1.msra.mxu0 %v1218
  %1289 = vmatprep.subr.mxu0 0.0
  %1290 = vmatpush1.msra.mxu0 %v1219
  %1291 = vmatprep.subr.mxu0 0.0
  %1292 = vmatpush1.msra.mxu0 %v1220
  %1293 = vmatprep.subr.mxu0 0.0
  %1294 = vmatpush1.msra.mxu0 %v1221
  %1295 = vmatprep.subr.mxu0 0.0
  %1296 = vmatpush1.msra.mxu0 %v1222
  %1297 = vmatprep.subr.mxu0 0.0
  %1298 = vmatpush1.msra.mxu0 %v1223
  %1299 = vmatprep.subr.mxu0 0.0
  %1300 = vmatpush1.msra.mxu0 %v1224
  %1301 = vmatprep.subr.mxu0 0.0
  %1302 = vmatpush1.msra.mxu0 %v1225
  %1303 = vmatprep.subr.mxu0 0.0
  %1304 = vmatpush1.msra.mxu0 0.0
  %1305 = vmatprep.subr.mxu0 0.0
  %1306 = vmatpush1.msra.mxu0 0.0
  %1307 = vmatprep.subr.mxu0 0.0
  %1308 = vmatpush1.msra.mxu0 0.0
  %1309 = vmatprep.subr.mxu0 0.0
  %1310 = vmatpush1.msra.mxu0 0.0
  %1311 = vmatprep.subr.mxu0 0.0
  %1312 = vmatpush1.msra.mxu0 0.0
  %1313 = vmatprep.subr.mxu0 0.0
  %1314 = vmatpush1.msra.mxu0 0.0
  %1315 = vmatprep.subr.mxu0 0.0
  %1316 = vmatpush1.msra.mxu0 0.0
  %1317 = vmatprep.subr.mxu0 0.0
  %1318 = vmatpush1.msra.mxu0 0.0
  %1319 = vmatprep.subr.mxu0 0.0
  %1320 = vmatpush1.msra.mxu0 0.0
  %1321 = vmatprep.subr.mxu0 0.0
  %1322 = vmatpush1.msra.mxu0 0.0
  %1323 = vmatprep.subr.mxu0 0.0
  %1324 = vmatpush1.msra.mxu0 0.0
  %1325 = vmatprep.subr.mxu0 0.0
  %1326 = vmatpush1.msra.mxu0 0.0
  %1327 = vmatprep.subr.mxu0 0.0
  %1328 = vmatpush1.msra.mxu0 0.0
  %1329 = vmatprep.subr.mxu0 0.0
  %1330 = vmatpush1.msra.mxu0 0.0
  %1331 = vmatprep.subr.mxu0 0.0
  %1332 = vmatpush1.msra.mxu0 0.0
  %1333 = vmatprep.subr.mxu0 0.0
  %1334 = vmatpush1.msra.mxu0 0.0
  %1335 = vmatprep.subr.mxu0 0.0
  %1336 = vmatpush1.msra.mxu0 0.0
  %1337 = vmatprep.subr.mxu0 0.0
  %1338 = vmatpush1.msra.mxu0 0.0
  %1339 = vmatprep.subr.mxu0 0.0
  %1340 = vmatpush1.msra.mxu0 0.0
  %1341 = vmatprep.subr.mxu0 0.0
  %1342 = vmatpush1.msra.mxu0 0.0
  %1343 = vmatprep.subr.mxu0 0.0
  %1344 = vmatpush1.msra.mxu0 0.0
  %1345 = vmatprep.subr.mxu0 0.0
  %1346 = vmatpush1.msra.mxu0 0.0
  %1347 = vmatprep.subr.mxu0 0.0
  %1348 = vmatpush1.msra.mxu0 0.0
  %1349 = vmatprep.subr.mxu0 0.0
  %1350 = vmatpush1.msra.mxu0 0.0
  %1351 = vmatprep.mubr.f32.mxu0 0.0
  %1352 = vmatmul.mubr.f32.gmra.mrb[0].mxu0 %v1285
  %v1353 = vpop.f32.mrb[0].mxu0
  %v1354 = vadd.f32 0.0, %v1353
  %v1355 = vpop.f32.mrb[0].mxu0
  %1356 = vdwg.mxu0
  %v1357 = vrsqrt.pop %v1354
  %v1358 = vmul.f32 %v1354, %v1357
  %vm1359 = vcmp.eq.f32.partialorder %v1354, inf
  %v1360 = vsel %vm1359, %v1354, %v1358
  %vm1361 = vcmp.eq.f32.partialorder %v1354, 0.0
  %v1362 = vand.u32 %v1354, 2147483648
  %v1363 = vsel %vm1361, %v1362, %v1360
  %v1364 = vadd.f32 %v1354, 1.0
  %v1365 = vrcp.pop %v1364
  %v1366 = vmul.f32 %v1363, %v1365
  %v1367 = vmul.f32 %v1366, %v1281
  %v1368 = vmul.f32 %v120, %v1367
  %v1369 = vmul.f32 %v193, %v1367
  %v1370 = vmul.f32 %v266, %v1367
  %v1371 = vmul.f32 %v339, %v1367
  %v1372 = vmul.f32 %v412, %v1367
  %v1373 = vmul.f32 %v485, %v1367
  %v1374 = vmul.f32 %v558, %v1367
  %v1375 = vmul.f32 %v631, %v1367
  %v1376 = vmul.f32 %v704, %v1367
  %v1377 = vmul.f32 %v777, %v1367
  %v1378 = vmul.f32 %v850, %v1367
  %v1379 = vmul.f32 %v923, %v1367
  %v1380 = vmul.f32 %v996, %v1367
  %v1381 = vmul.f32 %v1069, %v1367
  %v1382 = vmul.f32 %v1142, %v1367
  %v1383 = vmul.f32 %v1215, %v1367
  %v1384 = vsel %vm1250, %v1368, 0.0
  %v1385 = vrot.slane %v1384, 4
  %v1386 = vadd.f32 %v1384, %v1385
  %v1387 = vrot.slane %v1386, 2
  %v1388 = vadd.f32 %v1386, %v1387
  %v1389 = vrot.slane %v1388, 1
  %v1390 = vadd.f32 %v1388, %v1389
  %v1391 = vsel %vm1250, %v1369, 0.0
  %v1392 = vrot.slane %v1391, 4
  %v1393 = vadd.f32 %v1391, %v1392
  %v1394 = vrot.slane %v1393, 2
  %v1395 = vadd.f32 %v1393, %v1394
  %v1396 = vrot.slane %v1395, 1
  %v1397 = vadd.f32 %v1395, %v1396
  %v1398 = vsel %vm1250, %v1370, 0.0
  %v1399 = vrot.slane %v1398, 4
  %v1400 = vadd.f32 %v1398, %v1399
  %v1401 = vrot.slane %v1400, 2
  %v1402 = vadd.f32 %v1400, %v1401
  %v1403 = vrot.slane %v1402, 1
  %v1404 = vadd.f32 %v1402, %v1403
  %v1405 = vsel %vm1250, %v1371, 0.0
  %v1406 = vrot.slane %v1405, 4
  %v1407 = vadd.f32 %v1405, %v1406
  %v1408 = vrot.slane %v1407, 2
  %v1409 = vadd.f32 %v1407, %v1408
  %v1410 = vrot.slane %v1409, 1
  %v1411 = vadd.f32 %v1409, %v1410
  %v1412 = vsel %vm1250, %v1372, 0.0
  %v1413 = vrot.slane %v1412, 4
  %v1414 = vadd.f32 %v1412, %v1413
  %v1415 = vrot.slane %v1414, 2
  %v1416 = vadd.f32 %v1414, %v1415
  %v1417 = vrot.slane %v1416, 1
  %v1418 = vadd.f32 %v1416, %v1417
  %v1419 = vsel %vm1250, %v1373, 0.0
  %v1420 = vrot.slane %v1419, 4
  %v1421 = vadd.f32 %v1419, %v1420
  %v1422 = vrot.slane %v1421, 2
  %v1423 = vadd.f32 %v1421, %v1422
  %v1424 = vrot.slane %v1423, 1
  %v1425 = vadd.f32 %v1423, %v1424
  %v1426 = vsel %vm1250, %v1374, 0.0
  %v1427 = vrot.slane %v1426, 4
  %v1428 = vadd.f32 %v1426, %v1427
  %v1429 = vrot.slane %v1428, 2
  %v1430 = vadd.f32 %v1428, %v1429
  %v1431 = vrot.slane %v1430, 1
  %v1432 = vadd.f32 %v1430, %v1431
  %v1433 = vsel %vm1250, %v1375, 0.0
  %v1434 = vrot.slane %v1433, 4
  %v1435 = vadd.f32 %v1433, %v1434
  %v1436 = vrot.slane %v1435, 2
  %v1437 = vadd.f32 %v1435, %v1436
  %v1438 = vrot.slane %v1437, 1
  %v1439 = vadd.f32 %v1437, %v1438
  %v1440 = vsel %vm1250, %v1376, 0.0
  %v1441 = vrot.slane %v1440, 4
  %v1442 = vadd.f32 %v1440, %v1441
  %v1443 = vrot.slane %v1442, 2
  %v1444 = vadd.f32 %v1442, %v1443
  %v1445 = vrot.slane %v1444, 1
  %v1446 = vadd.f32 %v1444, %v1445
  %v1447 = vsel %vm1250, %v1377, 0.0
  %v1448 = vrot.slane %v1447, 4
  %v1449 = vadd.f32 %v1447, %v1448
  %v1450 = vrot.slane %v1449, 2
  %v1451 = vadd.f32 %v1449, %v1450
  %v1452 = vrot.slane %v1451, 1
  %v1453 = vadd.f32 %v1451, %v1452
  %v1454 = vsel %vm1250, %v1378, 0.0
  %v1455 = vrot.slane %v1454, 4
  %v1456 = vadd.f32 %v1454, %v1455
  %v1457 = vrot.slane %v1456, 2
  %v1458 = vadd.f32 %v1456, %v1457
  %v1459 = vrot.slane %v1458, 1
  %v1460 = vadd.f32 %v1458, %v1459
  %v1461 = vsel %vm1250, %v1379, 0.0
  %v1462 = vrot.slane %v1461, 4
  %v1463 = vadd.f32 %v1461, %v1462
  %v1464 = vrot.slane %v1463, 2
  %v1465 = vadd.f32 %v1463, %v1464
  %v1466 = vrot.slane %v1465, 1
  %v1467 = vadd.f32 %v1465, %v1466
  %v1468 = vsel %vm1250, %v1380, 0.0
  %v1469 = vrot.slane %v1468, 4
  %v1470 = vadd.f32 %v1468, %v1469
  %v1471 = vrot.slane %v1470, 2
  %v1472 = vadd.f32 %v1470, %v1471
  %v1473 = vrot.slane %v1472, 1
  %v1474 = vadd.f32 %v1472, %v1473
  %v1475 = vsel %vm1250, %v1381, 0.0
  %v1476 = vrot.slane %v1475, 4
  %v1477 = vadd.f32 %v1475, %v1476
  %v1478 = vrot.slane %v1477, 2
  %v1479 = vadd.f32 %v1477, %v1478
  %v1480 = vrot.slane %v1479, 1
  %v1481 = vadd.f32 %v1479, %v1480
  %v1482 = vsel %vm1250, %v1382, 0.0
  %v1483 = vrot.slane %v1482, 4
  %v1484 = vadd.f32 %v1482, %v1483
  %v1485 = vrot.slane %v1484, 2
  %v1486 = vadd.f32 %v1484, %v1485
  %v1487 = vrot.slane %v1486, 1
  %v1488 = vadd.f32 %v1486, %v1487
  %v1489 = vsel %vm1250, %v1383, 0.0
  %v1490 = vrot.slane %v1489, 4
  %v1491 = vadd.f32 %v1489, %v1490
  %v1492 = vrot.slane %v1491, 2
  %v1493 = vadd.f32 %v1491, %v1492
  %v1494 = vrot.slane %v1493, 1
  %v1495 = vadd.f32 %v1493, %v1494
  %vm1512 = vcmask 1041409
  %v1513 = vsel %vm1512, %v1397, %v1390
  %vm1514 = vcmask 1042434
  %v1515 = vsel %vm1514, %v1404, %v1513
  %vm1516 = vcmask 1043459
  %v1517 = vsel %vm1516, %v1411, %v1515
  %vm1518 = vcmask 1044484
  %v1519 = vsel %vm1518, %v1418, %v1517
  %vm1520 = vcmask 1045509
  %v1521 = vsel %vm1520, %v1425, %v1519
  %vm1522 = vcmask 1046534
  %v1523 = vsel %vm1522, %v1432, %v1521
  %vm1524 = vcmask 1047559
  %v1525 = vsel %vm1524, %v1439, %v1523
  %v1526 = vsel %vm1512, %v1453, %v1446
  %v1527 = vsel %vm1514, %v1460, %v1526
  %v1528 = vsel %vm1516, %v1467, %v1527
  %v1529 = vsel %vm1518, %v1474, %v1528
  %v1530 = vsel %vm1520, %v1481, %v1529
  %v1531 = vsel %vm1522, %v1488, %v1530
  %v1532 = vsel %vm1524, %v1495, %v1531
  %v1533 = vsel %vm1283, %v1525, 0
  %v1535 = vsel %vm1283, %v1532, 0
  %1537 = vmatprep.subr.mxu0 0.0
  %1538 = vmatpush1.msra.mxu0 %v1226
  %1539 = vmatprep.subr.mxu0 0.0
  %1540 = vmatpush1.msra.mxu0 %v1227
  %1541 = vmatprep.subr.mxu0 0.0
  %1542 = vmatpush1.msra.mxu0 %v1228
  %1543 = vmatprep.subr.mxu0 0.0
  %1544 = vmatpush1.msra.mxu0 %v1229
  %1545 = vmatprep.subr.mxu0 0.0
  %1546 = vmatpush1.msra.mxu0 %v1230
  %1547 = vmatprep.subr.mxu0 0.0
  %1548 = vmatpush1.msra.mxu0 %v1231
  %1549 = vmatprep.subr.mxu0 0.0
  %1550 = vmatpush1.msra.mxu0 %v1232
  %1551 = vmatprep.subr.mxu0 0.0
  %1552 = vmatpush1.msra.mxu0 %v1233
  %1553 = vmatprep.subr.mxu0 0.0
  %1554 = vmatpush1.msra.mxu0 0.0
  %1555 = vmatprep.subr.mxu0 0.0
  %1556 = vmatpush1.msra.mxu0 0.0
  %1557 = vmatprep.subr.mxu0 0.0
  %1558 = vmatpush1.msra.mxu0 0.0
  %1559 = vmatprep.subr.mxu0 0.0
  %1560 = vmatpush1.msra.mxu0 0.0
  %1561 = vmatprep.subr.mxu0 0.0
  %1562 = vmatpush1.msra.mxu0 0.0
  %1563 = vmatprep.subr.mxu0 0.0
  %1564 = vmatpush1.msra.mxu0 0.0
  %1565 = vmatprep.subr.mxu0 0.0
  %1566 = vmatpush1.msra.mxu0 0.0
  %1567 = vmatprep.subr.mxu0 0.0
  %1568 = vmatpush1.msra.mxu0 0.0
  %1569 = vmatprep.subr.mxu0 0.0
  %1570 = vmatpush1.msra.mxu0 0.0
  %1571 = vmatprep.subr.mxu0 0.0
  %1572 = vmatpush1.msra.mxu0 0.0
  %1573 = vmatprep.subr.mxu0 0.0
  %1574 = vmatpush1.msra.mxu0 0.0
  %1575 = vmatprep.subr.mxu0 0.0
  %1576 = vmatpush1.msra.mxu0 0.0
  %1577 = vmatprep.subr.mxu0 0.0
  %1578 = vmatpush1.msra.mxu0 0.0
  %1579 = vmatprep.subr.mxu0 0.0
  %1580 = vmatpush1.msra.mxu0 0.0
  %1581 = vmatprep.subr.mxu0 0.0
  %1582 = vmatpush1.msra.mxu0 0.0
  %1583 = vmatprep.subr.mxu0 0.0
  %1584 = vmatpush1.msra.mxu0 0.0
  %1585 = vmatprep.subr.mxu0 0.0
  %1586 = vmatpush1.msra.mxu0 0.0
  %1587 = vmatprep.subr.mxu0 0.0
  %1588 = vmatpush1.msra.mxu0 0.0
  %1589 = vmatprep.subr.mxu0 0.0
  %1590 = vmatpush1.msra.mxu0 0.0
  %1591 = vmatprep.subr.mxu0 0.0
  %1592 = vmatpush1.msra.mxu0 0.0
  %1593 = vmatprep.subr.mxu0 0.0
  %1594 = vmatpush1.msra.mxu0 0.0
  %1595 = vmatprep.subr.mxu0 0.0
  %1596 = vmatpush1.msra.mxu0 0.0
  %1597 = vmatprep.subr.mxu0 0.0
  %1598 = vmatpush1.msra.mxu0 0.0
  %1599 = vmatprep.subr.mxu0 0.0
  %1600 = vmatpush1.msra.mxu0 0.0
  %1601 = vmatprep.mubr.f32.mxu0 0.0
  %1602 = vmatmul.mubr.f32.gmra.mrb[0].mxu0 %v1533
  %v1603 = vpop.f32.mrb[0].mxu0
  %v1604 = vadd.f32 0.0, %v1603
  %v1605 = vpop.f32.mrb[0].mxu0
  %1606 = vmatprep.mubr.f32.mxu0 0.0
  %1607 = vmatmul.mubr.f32.gmra.mrb[0].mxu0 %v1535
  %v1608 = vpop.f32.mrb[0].mxu0
  %v1609 = vadd.f32 0.0, %v1608
  %v1610 = vpop.f32.mrb[0].mxu0
  %1611 = vdwg.mxu0
  %v1612 = vmul.f32 %v1604, 0.5
  %v1613 = vmul.f32 %v1609, 0.5
  %v1614 = vadd.f32 %v1612, 0.0
  %v1615 = vadd.f32 %v1613, 0.0
  %v1616 = vsel %vm1283, %v1614, -inf
  %v1617 = vsel %vm1283, %v1615, -inf
  %v1618 = vmax.f32 %v1616, %v1617
  %v1619 = vrot.slane %v1618, 4
  %v1620 = vmax.f32 %v1618, %v1619
  %v1621 = vrot.slane %v1620, 2
  %v1622 = vmax.f32 %v1620, %v1621
  %v1623 = vrot.slane %v1622, 1
  %v1624 = vmax.f32 %v1622, %v1623
  %v1625 = vsub.f32 %v1614, %v1624
  %v1626 = vsub.f32 %v1615, %v1624
  %v1627 = vmul.f32 %v1625, 1.442695
  %v1628 = vpow.pop %v1627
  %v1629 = vmul.f32 %v1626, 1.442695
  %v1630 = vpow.pop %v1629
  %v1631 = vsel %vm1283, %v1628, 0.0
  %v1632 = vsel %vm1283, %v1630, 0.0
  %v1633 = vadd.f32 %v1631, %v1632
  %v1634 = vrot.slane %v1633, 4
  %v1635 = vadd.f32 %v1633, %v1634
  %v1636 = vrot.slane %v1635, 2
  %v1637 = vadd.f32 %v1635, %v1636
  %v1638 = vrot.slane %v1637, 1
  %v1639 = vadd.f32 %v1637, %v1638
  %v1640 = vrcp.pop %v1639
  %v1641 = vmul.f32 %v1628, %v1640
  %v1642 = vmul.f32 %v1630, %v1640
  %v1645 = vcombine.high %v1641, %v1641
  %v1647 = vunpack.c.l.s4 1966171168
  %v1648 = vunpack.c.0.s8 %v1647
  %v1649 = vlaneseq
  %v1650 = vshrl.u32 %v1649, 7
  %v1651 = vsub.s32 %v1648, %v1650
  %v1652 = vrot.slane %v1641, %v1651
  %v1654 = vunpack.c.l.s4 1966171168
  %v1655 = vunpack.c.0.s8 %v1654
  %v1656 = vlaneseq
  %v1657 = vshrl.u32 %v1656, 7
  %v1658 = vsub.s32 %v1655, %v1657
  %v1659 = vrot.slane %v1645, %v1658
  %v1660 = vcombine.high %v1652, %v1652
  %v1661 = vcombine.high %v1659, %v1659
  %v1663 = vunpack.c.l.s4 1966171168
  %v1664 = vunpack.c.0.s8 %v1663
  %v1665 = vlaneseq
  %v1666 = vshrl.u32 %v1665, 7
  %v1667 = vsub.s32 %v1664, %v1666
  %v1668 = vrot.slane %v1652, %v1667
  %v1670 = vunpack.c.l.s4 1966171168
  %v1671 = vunpack.c.0.s8 %v1670
  %v1672 = vlaneseq
  %v1673 = vshrl.u32 %v1672, 7
  %v1674 = vsub.s32 %v1671, %v1673
  %v1675 = vrot.slane %v1659, %v1674
  %v1677 = vunpack.c.l.s4 1966171168
  %v1678 = vunpack.c.0.s8 %v1677
  %v1679 = vlaneseq
  %v1680 = vshrl.u32 %v1679, 7
  %v1681 = vsub.s32 %v1678, %v1680
  %v1682 = vrot.slane %v1660, %v1681
  %v1684 = vunpack.c.l.s4 1966171168
  %v1685 = vunpack.c.0.s8 %v1684
  %v1686 = vlaneseq
  %v1687 = vshrl.u32 %v1686, 7
  %v1688 = vsub.s32 %v1685, %v1687
  %v1689 = vrot.slane %v1661, %v1688
  %v1690 = vcombine.high %v1668, %v1668
  %v1691 = vcombine.high %v1675, %v1675
  %v1692 = vcombine.high %v1682, %v1682
  %v1693 = vcombine.high %v1689, %v1689
  %v1694 = vcombine.high %v1642, %v1642
  %v1696 = vunpack.c.l.s4 1966171168
  %v1697 = vunpack.c.0.s8 %v1696
  %v1698 = vlaneseq
  %v1699 = vshrl.u32 %v1698, 7
  %v1700 = vsub.s32 %v1697, %v1699
  %v1701 = vrot.slane %v1642, %v1700
  %v1703 = vunpack.c.l.s4 1966171168
  %v1704 = vunpack.c.0.s8 %v1703
  %v1705 = vlaneseq
  %v1706 = vshrl.u32 %v1705, 7
  %v1707 = vsub.s32 %v1704, %v1706
  %v1708 = vrot.slane %v1694, %v1707
  %v1709 = vcombine.high %v1701, %v1701
  %v1710 = vcombine.high %v1708, %v1708
  %v1712 = vunpack.c.l.s4 1966171168
  %v1713 = vunpack.c.0.s8 %v1712
  %v1714 = vlaneseq
  %v1715 = vshrl.u32 %v1714, 7
  %v1716 = vsub.s32 %v1713, %v1715
  %v1717 = vrot.slane %v1701, %v1716
  %v1719 = vunpack.c.l.s4 1966171168
  %v1720 = vunpack.c.0.s8 %v1719
  %v1721 = vlaneseq
  %v1722 = vshrl.u32 %v1721, 7
  %v1723 = vsub.s32 %v1720, %v1722
  %v1724 = vrot.slane %v1708, %v1723
  %v1726 = vunpack.c.l.s4 1966171168
  %v1727 = vunpack.c.0.s8 %v1726
  %v1728 = vlaneseq
  %v1729 = vshrl.u32 %v1728, 7
  %v1730 = vsub.s32 %v1727, %v1729
  %v1731 = vrot.slane %v1709, %v1730
  %v1733 = vunpack.c.l.s4 1966171168
  %v1734 = vunpack.c.0.s8 %v1733
  %v1735 = vlaneseq
  %v1736 = vshrl.u32 %v1735, 7
  %v1737 = vsub.s32 %v1734, %v1736
  %v1738 = vrot.slane %v1710, %v1737
  %v1739 = vcombine.high %v1717, %v1717
  %v1740 = vcombine.high %v1724, %v1724
  %v1741 = vcombine.high %v1731, %v1731
  %v1742 = vcombine.high %v1738, %v1738
  %v1743 = vlaneseq
  %v1744 = vshrl.u32 %v1743, 7
  %v1745 = vsub.s32 0, %v1744
  %v1746 = vrot.slane %v1668, %v1745
  %v1747 = vlaneseq
  %v1748 = vshrl.u32 %v1747, 7
  %v1749 = vsub.s32 0, %v1748
  %v1750 = vrot.slane %v1682, %v1749
  %v1751 = vlaneseq
  %v1752 = vshrl.u32 %v1751, 7
  %v1753 = vsub.s32 0, %v1752
  %v1754 = vrot.slane %v1690, %v1753
  %v1755 = vlaneseq
  %v1756 = vshrl.u32 %v1755, 7
  %v1757 = vsub.s32 0, %v1756
  %v1758 = vrot.slane %v1692, %v1757
  %v1759 = vlaneseq
  %v1760 = vshrl.u32 %v1759, 7
  %v1761 = vsub.s32 0, %v1760
  %v1762 = vrot.slane %v1675, %v1761
  %v1763 = vlaneseq
  %v1764 = vshrl.u32 %v1763, 7
  %v1765 = vsub.s32 0, %v1764
  %v1766 = vrot.slane %v1689, %v1765
  %v1767 = vlaneseq
  %v1768 = vshrl.u32 %v1767, 7
  %v1769 = vsub.s32 0, %v1768
  %v1770 = vrot.slane %v1691, %v1769
  %v1771 = vlaneseq
  %v1772 = vshrl.u32 %v1771, 7
  %v1773 = vsub.s32 0, %v1772
  %v1774 = vrot.slane %v1693, %v1773
  %v1775 = vlaneseq
  %v1776 = vshrl.u32 %v1775, 7
  %v1777 = vsub.s32 0, %v1776
  %v1778 = vrot.slane %v1717, %v1777
  %v1779 = vlaneseq
  %v1780 = vshrl.u32 %v1779, 7
  %v1781 = vsub.s32 0, %v1780
  %v1782 = vrot.slane %v1731, %v1781
  %v1783 = vlaneseq
  %v1784 = vshrl.u32 %v1783, 7
  %v1785 = vsub.s32 0, %v1784
  %v1786 = vrot.slane %v1739, %v1785
  %v1787 = vlaneseq
  %v1788 = vshrl.u32 %v1787, 7
  %v1789 = vsub.s32 0, %v1788
  %v1790 = vrot.slane %v1741, %v1789
  %v1791 = vlaneseq
  %v1792 = vshrl.u32 %v1791, 7
  %v1793 = vsub.s32 0, %v1792
  %v1794 = vrot.slane %v1724, %v1793
  %v1795 = vlaneseq
  %v1796 = vshrl.u32 %v1795, 7
  %v1797 = vsub.s32 0, %v1796
  %v1798 = vrot.slane %v1738, %v1797
  %v1799 = vlaneseq
  %v1800 = vshrl.u32 %v1799, 7
  %v1801 = vsub.s32 0, %v1800
  %v1802 = vrot.slane %v1740, %v1801
  %v1803 = vlaneseq
  %v1804 = vshrl.u32 %v1803, 7
  %v1805 = vsub.s32 0, %v1804
  %v1806 = vrot.slane %v1742, %v1805
  %v1823 = vmul.f32 %v1746, %v120
  %v1824 = vmul.f32 %v1750, %v193
  %v1825 = vmul.f32 %v1754, %v266
  %v1826 = vmul.f32 %v1758, %v339
  %v1827 = vmul.f32 %v1762, %v412
  %v1828 = vmul.f32 %v1766, %v485
  %v1829 = vmul.f32 %v1770, %v558
  %v1830 = vmul.f32 %v1774, %v631
  %v1831 = vmul.f32 %v1778, %v704
  %v1832 = vmul.f32 %v1782, %v777
  %v1833 = vmul.f32 %v1786, %v850
  %v1834 = vmul.f32 %v1790, %v923
  %v1835 = vmul.f32 %v1794, %v996
  %v1836 = vmul.f32 %v1798, %v1069
  %v1837 = vmul.f32 %v1802, %v1142
  %v1838 = vmul.f32 %v1806, %v1215
  %v1839 = vsel %vm1250, %v1823, 0.0
  %v1840 = vsel %vm1250, %v1824, 0.0
  %v1841 = vadd.f32 %v1839, %v1840
  %v1842 = vsel %vm1250, %v1825, 0.0
  %v1843 = vadd.f32 %v1841, %v1842
  %v1844 = vsel %vm1250, %v1826, 0.0
  %v1845 = vadd.f32 %v1843, %v1844
  %v1846 = vsel %vm1250, %v1827, 0.0
  %v1847 = vadd.f32 %v1845, %v1846
  %v1848 = vsel %vm1250, %v1828, 0.0
  %v1849 = vadd.f32 %v1847, %v1848
  %v1850 = vsel %vm1250, %v1829, 0.0
  %v1851 = vadd.f32 %v1849, %v1850
  %v1852 = vsel %vm1250, %v1830, 0.0
  %v1853 = vadd.f32 %v1851, %v1852
  %v1854 = vsel %vm1250, %v1831, 0.0
  %v1855 = vadd.f32 %v1853, %v1854
  %v1856 = vsel %vm1250, %v1832, 0.0
  %v1857 = vadd.f32 %v1855, %v1856
  %v1858 = vsel %vm1250, %v1833, 0.0
  %v1859 = vadd.f32 %v1857, %v1858
  %v1860 = vsel %vm1250, %v1834, 0.0
  %v1861 = vadd.f32 %v1859, %v1860
  %v1862 = vsel %vm1250, %v1835, 0.0
  %v1863 = vadd.f32 %v1861, %v1862
  %v1864 = vsel %vm1250, %v1836, 0.0
  %v1865 = vadd.f32 %v1863, %v1864
  %v1866 = vsel %vm1250, %v1837, 0.0
  %v1867 = vadd.f32 %v1865, %v1866
  %v1868 = vsel %vm1250, %v1838, 0.0
  %v1869 = vadd.f32 %v1867, %v1868
  %v1870 = vmul.f32 %v1869, %v1869
  %v1872 = vsel %vm1283, %v1870, 0
  %1874 = vmatprep.subr.mxu0 0.0
  %1875 = vmatpush1.msra.mxu0 %v1218
  %1876 = vmatprep.subr.mxu0 0.0
  %1877 = vmatpush1.msra.mxu0 %v1219
  %1878 = vmatprep.subr.mxu0 0.0
  %1879 = vmatpush1.msra.mxu0 %v1220
  %1880 = vmatprep.subr.mxu0 0.0
  %1881 = vmatpush1.msra.mxu0 %v1221
  %1882 = vmatprep.subr.mxu0 0.0
  %1883 = vmatpush1.msra.mxu0 %v1222
  %1884 = vmatprep.subr.mxu0 0.0
  %1885 = vmatpush1.msra.mxu0 %v1223
  %1886 = vmatprep.subr.mxu0 0.0
  %1887 = vmatpush1.msra.mxu0 %v1224
  %1888 = vmatprep.subr.mxu0 0.0
  %1889 = vmatpush1.msra.mxu0 %v1225
  %1890 = vmatprep.subr.mxu0 0.0
  %1891 = vmatpush1.msra.mxu0 0.0
  %1892 = vmatprep.subr.mxu0 0.0
  %1893 = vmatpush1.msra.mxu0 0.0
  %1894 = vmatprep.subr.mxu0 0.0
  %1895 = vmatpush1.msra.mxu0 0.0
  %1896 = vmatprep.subr.mxu0 0.0
  %1897 = vmatpush1.msra.mxu0 0.0
  %1898 = vmatprep.subr.mxu0 0.0
  %1899 = vmatpush1.msra.mxu0 0.0
  %1900 = vmatprep.subr.mxu0 0.0
  %1901 = vmatpush1.msra.mxu0 0.0
  %1902 = vmatprep.subr.mxu0 0.0
  %1903 = vmatpush1.msra.mxu0 0.0
  %1904 = vmatprep.subr.mxu0 0.0
  %1905 = vmatpush1.msra.mxu0 0.0
  %1906 = vmatprep.subr.mxu0 0.0
  %1907 = vmatpush1.msra.mxu0 0.0
  %1908 = vmatprep.subr.mxu0 0.0
  %1909 = vmatpush1.msra.mxu0 0.0
  %1910 = vmatprep.subr.mxu0 0.0
  %1911 = vmatpush1.msra.mxu0 0.0
  %1912 = vmatprep.subr.mxu0 0.0
  %1913 = vmatpush1.msra.mxu0 0.0
  %1914 = vmatprep.subr.mxu0 0.0
  %1915 = vmatpush1.msra.mxu0 0.0
  %1916 = vmatprep.subr.mxu0 0.0
  %1917 = vmatpush1.msra.mxu0 0.0
  %1918 = vmatprep.subr.mxu0 0.0
  %1919 = vmatpush1.msra.mxu0 0.0
  %1920 = vmatprep.subr.mxu0 0.0
  %1921 = vmatpush1.msra.mxu0 0.0
  %1922 = vmatprep.subr.mxu0 0.0
  %1923 = vmatpush1.msra.mxu0 0.0
  %1924 = vmatprep.subr.mxu0 0.0
  %1925 = vmatpush1.msra.mxu0 0.0
  %1926 = vmatprep.subr.mxu0 0.0
  %1927 = vmatpush1.msra.mxu0 0.0
  %1928 = vmatprep.subr.mxu0 0.0
  %1929 = vmatpush1.msra.mxu0 0.0
  %1930 = vmatprep.subr.mxu0 0.0
  %1931 = vmatpush1.msra.mxu0 0.0
  %1932 = vmatprep.subr.mxu0 0.0
  %1933 = vmatpush1.msra.mxu0 0.0
  %1934 = vmatprep.subr.mxu0 0.0
  %1935 = vmatpush1.msra.mxu0 0.0
  %1936 = vmatprep.subr.mxu0 0.0
  %1937 = vmatpush1.msra.mxu0 0.0
  %1938 = vmatprep.mubr.f32.mxu0 0.0
  %1939 = vmatmul.mubr.f32.gmra.mrb[0].mxu0 %v1872
  %v1940 = vpop.f32.mrb[0].mxu0
  %v1941 = vadd.f32 0.0, %v1940
  %v1942 = vpop.f32.mrb[0].mxu0
  %1943 = vdwg.mxu0
  %v1944 = vrsqrt.pop %v1941
  %v1945 = vmul.f32 %v1941, %v1944
  %vm1946 = vcmp.eq.f32.partialorder %v1941, inf
  %v1947 = vsel %vm1946, %v1941, %v1945
  %vm1948 = vcmp.eq.f32.partialorder %v1941, 0.0
  %v1949 = vand.u32 %v1941, 2147483648
  %v1950 = vsel %vm1948, %v1949, %v1947
  %v1951 = vadd.f32 %v1941, 1.0
  %v1952 = vrcp.pop %v1951
  %v1953 = vmul.f32 %v1950, %v1952
  %v1954 = vmul.f32 %v1953, %v1869
  %v1955 = vmul.f32 %v120, %v1954
  %v1956 = vmul.f32 %v193, %v1954
  %v1957 = vmul.f32 %v266, %v1954
  %v1958 = vmul.f32 %v339, %v1954
  %v1959 = vmul.f32 %v412, %v1954
  %v1960 = vmul.f32 %v485, %v1954
  %v1961 = vmul.f32 %v558, %v1954
  %v1962 = vmul.f32 %v631, %v1954
  %v1963 = vmul.f32 %v704, %v1954
  %v1964 = vmul.f32 %v777, %v1954
  %v1965 = vmul.f32 %v850, %v1954
  %v1966 = vmul.f32 %v923, %v1954
  %v1967 = vmul.f32 %v996, %v1954
  %v1968 = vmul.f32 %v1069, %v1954
  %v1969 = vmul.f32 %v1142, %v1954
  %v1970 = vmul.f32 %v1215, %v1954
  %v1971 = vsel %vm1250, %v1955, 0.0
  %v1972 = vrot.slane %v1971, 4
  %v1973 = vadd.f32 %v1971, %v1972
  %v1974 = vrot.slane %v1973, 2
  %v1975 = vadd.f32 %v1973, %v1974
  %v1976 = vrot.slane %v1975, 1
  %v1977 = vadd.f32 %v1975, %v1976
  %v1978 = vsel %vm1250, %v1956, 0.0
  %v1979 = vrot.slane %v1978, 4
  %v1980 = vadd.f32 %v1978, %v1979
  %v1981 = vrot.slane %v1980, 2
  %v1982 = vadd.f32 %v1980, %v1981
  %v1983 = vrot.slane %v1982, 1
  %v1984 = vadd.f32 %v1982, %v1983
  %v1985 = vsel %vm1250, %v1957, 0.0
  %v1986 = vrot.slane %v1985, 4
  %v1987 = vadd.f32 %v1985, %v1986
  %v1988 = vrot.slane %v1987, 2
  %v1989 = vadd.f32 %v1987, %v1988
  %v1990 = vrot.slane %v1989, 1
  %v1991 = vadd.f32 %v1989, %v1990
  %v1992 = vsel %vm1250, %v1958, 0.0
  %v1993 = vrot.slane %v1992, 4
  %v1994 = vadd.f32 %v1992, %v1993
  %v1995 = vrot.slane %v1994, 2
  %v1996 = vadd.f32 %v1994, %v1995
  %v1997 = vrot.slane %v1996, 1
  %v1998 = vadd.f32 %v1996, %v1997
  %v1999 = vsel %vm1250, %v1959, 0.0
  %v2000 = vrot.slane %v1999, 4
  %v2001 = vadd.f32 %v1999, %v2000
  %v2002 = vrot.slane %v2001, 2
  %v2003 = vadd.f32 %v2001, %v2002
  %v2004 = vrot.slane %v2003, 1
  %v2005 = vadd.f32 %v2003, %v2004
  %v2006 = vsel %vm1250, %v1960, 0.0
  %v2007 = vrot.slane %v2006, 4
  %v2008 = vadd.f32 %v2006, %v2007
  %v2009 = vrot.slane %v2008, 2
  %v2010 = vadd.f32 %v2008, %v2009
  %v2011 = vrot.slane %v2010, 1
  %v2012 = vadd.f32 %v2010, %v2011
  %v2013 = vsel %vm1250, %v1961, 0.0
  %v2014 = vrot.slane %v2013, 4
  %v2015 = vadd.f32 %v2013, %v2014
  %v2016 = vrot.slane %v2015, 2
  %v2017 = vadd.f32 %v2015, %v2016
  %v2018 = vrot.slane %v2017, 1
  %v2019 = vadd.f32 %v2017, %v2018
  %v2020 = vsel %vm1250, %v1962, 0.0
  %v2021 = vrot.slane %v2020, 4
  %v2022 = vadd.f32 %v2020, %v2021
  %v2023 = vrot.slane %v2022, 2
  %v2024 = vadd.f32 %v2022, %v2023
  %v2025 = vrot.slane %v2024, 1
  %v2026 = vadd.f32 %v2024, %v2025
  %v2027 = vsel %vm1250, %v1963, 0.0
  %v2028 = vrot.slane %v2027, 4
  %v2029 = vadd.f32 %v2027, %v2028
  %v2030 = vrot.slane %v2029, 2
  %v2031 = vadd.f32 %v2029, %v2030
  %v2032 = vrot.slane %v2031, 1
  %v2033 = vadd.f32 %v2031, %v2032
  %v2034 = vsel %vm1250, %v1964, 0.0
  %v2035 = vrot.slane %v2034, 4
  %v2036 = vadd.f32 %v2034, %v2035
  %v2037 = vrot.slane %v2036, 2
  %v2038 = vadd.f32 %v2036, %v2037
  %v2039 = vrot.slane %v2038, 1
  %v2040 = vadd.f32 %v2038, %v2039
  %v2041 = vsel %vm1250, %v1965, 0.0
  %v2042 = vrot.slane %v2041, 4
  %v2043 = vadd.f32 %v2041, %v2042
  %v2044 = vrot.slane %v2043, 2
  %v2045 = vadd.f32 %v2043, %v2044
  %v2046 = vrot.slane %v2045, 1
  %v2047 = vadd.f32 %v2045, %v2046
  %v2048 = vsel %vm1250, %v1966, 0.0
  %v2049 = vrot.slane %v2048, 4
  %v2050 = vadd.f32 %v2048, %v2049
  %v2051 = vrot.slane %v2050, 2
  %v2052 = vadd.f32 %v2050, %v2051
  %v2053 = vrot.slane %v2052, 1
  %v2054 = vadd.f32 %v2052, %v2053
  %v2055 = vsel %vm1250, %v1967, 0.0
  %v2056 = vrot.slane %v2055, 4
  %v2057 = vadd.f32 %v2055, %v2056
  %v2058 = vrot.slane %v2057, 2
  %v2059 = vadd.f32 %v2057, %v2058
  %v2060 = vrot.slane %v2059, 1
  %v2061 = vadd.f32 %v2059, %v2060
  %v2062 = vsel %vm1250, %v1968, 0.0
  %v2063 = vrot.slane %v2062, 4
  %v2064 = vadd.f32 %v2062, %v2063
  %v2065 = vrot.slane %v2064, 2
  %v2066 = vadd.f32 %v2064, %v2065
  %v2067 = vrot.slane %v2066, 1
  %v2068 = vadd.f32 %v2066, %v2067
  %v2069 = vsel %vm1250, %v1969, 0.0
  %v2070 = vrot.slane %v2069, 4
  %v2071 = vadd.f32 %v2069, %v2070
  %v2072 = vrot.slane %v2071, 2
  %v2073 = vadd.f32 %v2071, %v2072
  %v2074 = vrot.slane %v2073, 1
  %v2075 = vadd.f32 %v2073, %v2074
  %v2076 = vsel %vm1250, %v1970, 0.0
  %v2077 = vrot.slane %v2076, 4
  %v2078 = vadd.f32 %v2076, %v2077
  %v2079 = vrot.slane %v2078, 2
  %v2080 = vadd.f32 %v2078, %v2079
  %v2081 = vrot.slane %v2080, 1
  %v2082 = vadd.f32 %v2080, %v2081
  %v2099 = vsel %vm1512, %v1984, %v1977
  %v2100 = vsel %vm1514, %v1991, %v2099
  %v2101 = vsel %vm1516, %v1998, %v2100
  %v2102 = vsel %vm1518, %v2005, %v2101
  %v2103 = vsel %vm1520, %v2012, %v2102
  %v2104 = vsel %vm1522, %v2019, %v2103
  %v2105 = vsel %vm1524, %v2026, %v2104
  %v2106 = vsel %vm1512, %v2040, %v2033
  %v2107 = vsel %vm1514, %v2047, %v2106
  %v2108 = vsel %vm1516, %v2054, %v2107
  %v2109 = vsel %vm1518, %v2061, %v2108
  %v2110 = vsel %vm1520, %v2068, %v2109
  %v2111 = vsel %vm1522, %v2075, %v2110
  %v2112 = vsel %vm1524, %v2082, %v2111
  %v2113 = vsel %vm1283, %v2105, 0
  %v2115 = vsel %vm1283, %v2112, 0
  %2117 = vmatprep.subr.mxu0 0.0
  %2118 = vmatpush1.msra.mxu0 %v1226
  %2119 = vmatprep.subr.mxu0 0.0
  %2120 = vmatpush1.msra.mxu0 %v1227
  %2121 = vmatprep.subr.mxu0 0.0
  %2122 = vmatpush1.msra.mxu0 %v1228
  %2123 = vmatprep.subr.mxu0 0.0
  %2124 = vmatpush1.msra.mxu0 %v1229
  %2125 = vmatprep.subr.mxu0 0.0
  %2126 = vmatpush1.msra.mxu0 %v1230
  %2127 = vmatprep.subr.mxu0 0.0
  %2128 = vmatpush1.msra.mxu0 %v1231
  %2129 = vmatprep.subr.mxu0 0.0
  %2130 = vmatpush1.msra.mxu0 %v1232
  %2131 = vmatprep.subr.mxu0 0.0
  %2132 = vmatpush1.msra.mxu0 %v1233
  %2133 = vmatprep.subr.mxu0 0.0
  %2134 = vmatpush1.msra.mxu0 0.0
  %2135 = vmatprep.subr.mxu0 0.0
  %2136 = vmatpush1.msra.mxu0 0.0
  %2137 = vmatprep.subr.mxu0 0.0
  %2138 = vmatpush1.msra.mxu0 0.0
  %2139 = vmatprep.subr.mxu0 0.0
  %2140 = vmatpush1.msra.mxu0 0.0
  %2141 = vmatprep.subr.mxu0 0.0
  %2142 = vmatpush1.msra.mxu0 0.0
  %2143 = vmatprep.subr.mxu0 0.0
  %2144 = vmatpush1.msra.mxu0 0.0
  %2145 = vmatprep.subr.mxu0 0.0
  %2146 = vmatpush1.msra.mxu0 0.0
  %2147 = vmatprep.subr.mxu0 0.0
  %2148 = vmatpush1.msra.mxu0 0.0
  %2149 = vmatprep.subr.mxu0 0.0
  %2150 = vmatpush1.msra.mxu0 0.0
  %2151 = vmatprep.subr.mxu0 0.0
  %2152 = vmatpush1.msra.mxu0 0.0
  %2153 = vmatprep.subr.mxu0 0.0
  %2154 = vmatpush1.msra.mxu0 0.0
  %2155 = vmatprep.subr.mxu0 0.0
  %2156 = vmatpush1.msra.mxu0 0.0
  %2157 = vmatprep.subr.mxu0 0.0
  %2158 = vmatpush1.msra.mxu0 0.0
  %2159 = vmatprep.subr.mxu0 0.0
  %2160 = vmatpush1.msra.mxu0 0.0
  %2161 = vmatprep.subr.mxu0 0.0
  %2162 = vmatpush1.msra.mxu0 0.0
  %2163 = vmatprep.subr.mxu0 0.0
  %2164 = vmatpush1.msra.mxu0 0.0
  %2165 = vmatprep.subr.mxu0 0.0
  %2166 = vmatpush1.msra.mxu0 0.0
  %2167 = vmatprep.subr.mxu0 0.0
  %2168 = vmatpush1.msra.mxu0 0.0
  %2169 = vmatprep.subr.mxu0 0.0
  %2170 = vmatpush1.msra.mxu0 0.0
  %2171 = vmatprep.subr.mxu0 0.0
  %2172 = vmatpush1.msra.mxu0 0.0
  %2173 = vmatprep.subr.mxu0 0.0
  %2174 = vmatpush1.msra.mxu0 0.0
  %2175 = vmatprep.subr.mxu0 0.0
  %2176 = vmatpush1.msra.mxu0 0.0
  %2177 = vmatprep.subr.mxu0 0.0
  %2178 = vmatpush1.msra.mxu0 0.0
  %2179 = vmatprep.subr.mxu0 0.0
  %2180 = vmatpush1.msra.mxu0 0.0
  %2181 = vmatprep.mubr.f32.mxu0 0.0
  %2182 = vmatmul.mubr.f32.gmra.mrb[0].mxu0 %v2113
  %v2183 = vpop.f32.mrb[0].mxu0
  %v2184 = vadd.f32 0.0, %v2183
  %v2185 = vpop.f32.mrb[0].mxu0
  %2186 = vmatprep.mubr.f32.mxu0 0.0
  %2187 = vmatmul.mubr.f32.gmra.mrb[0].mxu0 %v2115
  %v2188 = vpop.f32.mrb[0].mxu0
  %v2189 = vadd.f32 0.0, %v2188
  %v2190 = vpop.f32.mrb[0].mxu0
  %2191 = vdwg.mxu0
  %v2192 = vmul.f32 %v2184, 0.5
  %v2193 = vmul.f32 %v2189, 0.5
  %v2194 = vadd.f32 %v1614, %v2192
  %v2195 = vadd.f32 %v1615, %v2193
  %v2196 = vsel %vm1283, %v2194, -inf
  %v2197 = vsel %vm1283, %v2195, -inf
  %v2198 = vmax.f32 %v2196, %v2197
  %v2199 = vrot.slane %v2198, 4
  %v2200 = vmax.f32 %v2198, %v2199
  %v2201 = vrot.slane %v2200, 2
  %v2202 = vmax.f32 %v2200, %v2201
  %v2203 = vrot.slane %v2202, 1
  %v2204 = vmax.f32 %v2202, %v2203
  %v2205 = vsub.f32 %v2194, %v2204
  %v2206 = vsub.f32 %v2195, %v2204
  %v2207 = vmul.f32 %v2205, 1.442695
  %v2208 = vpow.pop %v2207
  %v2209 = vmul.f32 %v2206, 1.442695
  %v2210 = vpow.pop %v2209
  %v2211 = vsel %vm1283, %v2208, 0.0
  %v2212 = vsel %vm1283, %v2210, 0.0
  %v2213 = vadd.f32 %v2211, %v2212
  %v2214 = vrot.slane %v2213, 4
  %v2215 = vadd.f32 %v2213, %v2214
  %v2216 = vrot.slane %v2215, 2
  %v2217 = vadd.f32 %v2215, %v2216
  %v2218 = vrot.slane %v2217, 1
  %v2219 = vadd.f32 %v2217, %v2218
  %v2220 = vrcp.pop %v2219
  %v2221 = vmul.f32 %v2208, %v2220
  %v2222 = vmul.f32 %v2210, %v2220
  %v2225 = vcombine.high %v2221, %v2221
  %v2227 = vunpack.c.l.s4 1966171168
  %v2228 = vunpack.c.0.s8 %v2227
  %v2229 = vlaneseq
  %v2230 = vshrl.u32 %v2229, 7
  %v2231 = vsub.s32 %v2228, %v2230
  %v2232 = vrot.slane %v2221, %v2231
  %v2234 = vunpack.c.l.s4 1966171168
  %v2235 = vunpack.c.0.s8 %v2234
  %v2236 = vlaneseq
  %v2237 = vshrl.u32 %v2236, 7
  %v2238 = vsub.s32 %v2235, %v2237
  %v2239 = vrot.slane %v2225, %v2238
  %v2240 = vcombine.high %v2232, %v2232
  %v2241 = vcombine.high %v2239, %v2239
  %v2243 = vunpack.c.l.s4 1966171168
  %v2244 = vunpack.c.0.s8 %v2243
  %v2245 = vlaneseq
  %v2246 = vshrl.u32 %v2245, 7
  %v2247 = vsub.s32 %v2244, %v2246
  %v2248 = vrot.slane %v2232, %v2247
  %v2250 = vunpack.c.l.s4 1966171168
  %v2251 = vunpack.c.0.s8 %v2250
  %v2252 = vlaneseq
  %v2253 = vshrl.u32 %v2252, 7
  %v2254 = vsub.s32 %v2251, %v2253
  %v2255 = vrot.slane %v2239, %v2254
  %v2257 = vunpack.c.l.s4 1966171168
  %v2258 = vunpack.c.0.s8 %v2257
  %v2259 = vlaneseq
  %v2260 = vshrl.u32 %v2259, 7
  %v2261 = vsub.s32 %v2258, %v2260
  %v2262 = vrot.slane %v2240, %v2261
  %v2264 = vunpack.c.l.s4 1966171168
  %v2265 = vunpack.c.0.s8 %v2264
  %v2266 = vlaneseq
  %v2267 = vshrl.u32 %v2266, 7
  %v2268 = vsub.s32 %v2265, %v2267
  %v2269 = vrot.slane %v2241, %v2268
  %v2270 = vcombine.high %v2248, %v2248
  %v2271 = vcombine.high %v2255, %v2255
  %v2272 = vcombine.high %v2262, %v2262
  %v2273 = vcombine.high %v2269, %v2269
  %v2274 = vcombine.high %v2222, %v2222
  %v2276 = vunpack.c.l.s4 1966171168
  %v2277 = vunpack.c.0.s8 %v2276
  %v2278 = vlaneseq
  %v2279 = vshrl.u32 %v2278, 7
  %v2280 = vsub.s32 %v2277, %v2279
  %v2281 = vrot.slane %v2222, %v2280
  %v2283 = vunpack.c.l.s4 1966171168
  %v2284 = vunpack.c.0.s8 %v2283
  %v2285 = vlaneseq
  %v2286 = vshrl.u32 %v2285, 7
  %v2287 = vsub.s32 %v2284, %v2286
  %v2288 = vrot.slane %v2274, %v2287
  %v2289 = vcombine.high %v2281, %v2281
  %v2290 = vcombine.high %v2288, %v2288
  %v2292 = vunpack.c.l.s4 1966171168
  %v2293 = vunpack.c.0.s8 %v2292
  %v2294 = vlaneseq
  %v2295 = vshrl.u32 %v2294, 7
  %v2296 = vsub.s32 %v2293, %v2295
  %v2297 = vrot.slane %v2281, %v2296
  %v2299 = vunpack.c.l.s4 1966171168
  %v2300 = vunpack.c.0.s8 %v2299
  %v2301 = vlaneseq
  %v2302 = vshrl.u32 %v2301, 7
  %v2303 = vsub.s32 %v2300, %v2302
  %v2304 = vrot.slane %v2288, %v2303
  %v2306 = vunpack.c.l.s4 1966171168
  %v2307 = vunpack.c.0.s8 %v2306
  %v2308 = vlaneseq
  %v2309 = vshrl.u32 %v2308, 7
  %v2310 = vsub.s32 %v2307, %v2309
  %v2311 = vrot.slane %v2289, %v2310
  %v2313 = vunpack.c.l.s4 1966171168
  %v2314 = vunpack.c.0.s8 %v2313
  %v2315 = vlaneseq
  %v2316 = vshrl.u32 %v2315, 7
  %v2317 = vsub.s32 %v2314, %v2316
  %v2318 = vrot.slane %v2290, %v2317
  %v2319 = vcombine.high %v2297, %v2297
  %v2320 = vcombine.high %v2304, %v2304
  %v2321 = vcombine.high %v2311, %v2311
  %v2322 = vcombine.high %v2318, %v2318
  %v2323 = vlaneseq
  %v2324 = vshrl.u32 %v2323, 7
  %v2325 = vsub.s32 0, %v2324
  %v2326 = vrot.slane %v2248, %v2325
  %v2327 = vlaneseq
  %v2328 = vshrl.u32 %v2327, 7
  %v2329 = vsub.s32 0, %v2328
  %v2330 = vrot.slane %v2262, %v2329
  %v2331 = vlaneseq
  %v2332 = vshrl.u32 %v2331, 7
  %v2333 = vsub.s32 0, %v2332
  %v2334 = vrot.slane %v2270, %v2333
  %v2335 = vlaneseq
  %v2336 = vshrl.u32 %v2335, 7
  %v2337 = vsub.s32 0, %v2336
  %v2338 = vrot.slane %v2272, %v2337
  %v2339 = vlaneseq
  %v2340 = vshrl.u32 %v2339, 7
  %v2341 = vsub.s32 0, %v2340
  %v2342 = vrot.slane %v2255, %v2341
  %v2343 = vlaneseq
  %v2344 = vshrl.u32 %v2343, 7
  %v2345 = vsub.s32 0, %v2344
  %v2346 = vrot.slane %v2269, %v2345
  %v2347 = vlaneseq
  %v2348 = vshrl.u32 %v2347, 7
  %v2349 = vsub.s32 0, %v2348
  %v2350 = vrot.slane %v2271, %v2349
  %v2351 = vlaneseq
  %v2352 = vshrl.u32 %v2351, 7
  %v2353 = vsub.s32 0, %v2352
  %v2354 = vrot.slane %v2273, %v2353
  %v2355 = vlaneseq
  %v2356 = vshrl.u32 %v2355, 7
  %v2357 = vsub.s32 0, %v2356
  %v2358 = vrot.slane %v2297, %v2357
  %v2359 = vlaneseq
  %v2360 = vshrl.u32 %v2359, 7
  %v2361 = vsub.s32 0, %v2360
  %v2362 = vrot.slane %v2311, %v2361
  %v2363 = vlaneseq
  %v2364 = vshrl.u32 %v2363, 7
  %v2365 = vsub.s32 0, %v2364
  %v2366 = vrot.slane %v2319, %v2365
  %v2367 = vlaneseq
  %v2368 = vshrl.u32 %v2367, 7
  %v2369 = vsub.s32 0, %v2368
  %v2370 = vrot.slane %v2321, %v2369
  %v2371 = vlaneseq
  %v2372 = vshrl.u32 %v2371, 7
  %v2373 = vsub.s32 0, %v2372
  %v2374 = vrot.slane %v2304, %v2373
  %v2375 = vlaneseq
  %v2376 = vshrl.u32 %v2375, 7
  %v2377 = vsub.s32 0, %v2376
  %v2378 = vrot.slane %v2318, %v2377
  %v2379 = vlaneseq
  %v2380 = vshrl.u32 %v2379, 7
  %v2381 = vsub.s32 0, %v2380
  %v2382 = vrot.slane %v2320, %v2381
  %v2383 = vlaneseq
  %v2384 = vshrl.u32 %v2383, 7
  %v2385 = vsub.s32 0, %v2384
  %v2386 = vrot.slane %v2322, %v2385
  %v2403 = vmul.f32 %v2326, %v120
  %v2404 = vmul.f32 %v2330, %v193
  %v2405 = vmul.f32 %v2334, %v266
  %v2406 = vmul.f32 %v2338, %v339
  %v2407 = vmul.f32 %v2342, %v412
  %v2408 = vmul.f32 %v2346, %v485
  %v2409 = vmul.f32 %v2350, %v558
  %v2410 = vmul.f32 %v2354, %v631
  %v2411 = vmul.f32 %v2358, %v704
  %v2412 = vmul.f32 %v2362, %v777
  %v2413 = vmul.f32 %v2366, %v850
  %v2414 = vmul.f32 %v2370, %v923
  %v2415 = vmul.f32 %v2374, %v996
  %v2416 = vmul.f32 %v2378, %v1069
  %v2417 = vmul.f32 %v2382, %v1142
  %v2418 = vmul.f32 %v2386, %v1215
  %v2419 = vsel %vm1250, %v2403, 0.0
  %v2420 = vsel %vm1250, %v2404, 0.0
  %v2421 = vadd.f32 %v2419, %v2420
  %v2422 = vsel %vm1250, %v2405, 0.0
  %v2423 = vadd.f32 %v2421, %v2422
  %v2424 = vsel %vm1250, %v2406, 0.0
  %v2425 = vadd.f32 %v2423, %v2424
  %v2426 = vsel %vm1250, %v2407, 0.0
  %v2427 = vadd.f32 %v2425, %v2426
  %v2428 = vsel %vm1250, %v2408, 0.0
  %v2429 = vadd.f32 %v2427, %v2428
  %v2430 = vsel %vm1250, %v2409, 0.0
  %v2431 = vadd.f32 %v2429, %v2430
  %v2432 = vsel %vm1250, %v2410, 0.0
  %v2433 = vadd.f32 %v2431, %v2432
  %v2434 = vsel %vm1250, %v2411, 0.0
  %v2435 = vadd.f32 %v2433, %v2434
  %v2436 = vsel %vm1250, %v2412, 0.0
  %v2437 = vadd.f32 %v2435, %v2436
  %v2438 = vsel %vm1250, %v2413, 0.0
  %v2439 = vadd.f32 %v2437, %v2438
  %v2440 = vsel %vm1250, %v2414, 0.0
  %v2441 = vadd.f32 %v2439, %v2440
  %v2442 = vsel %vm1250, %v2415, 0.0
  %v2443 = vadd.f32 %v2441, %v2442
  %v2444 = vsel %vm1250, %v2416, 0.0
  %v2445 = vadd.f32 %v2443, %v2444
  %v2446 = vsel %vm1250, %v2417, 0.0
  %v2447 = vadd.f32 %v2445, %v2446
  %v2448 = vsel %vm1250, %v2418, 0.0
  %v2449 = vadd.f32 %v2447, %v2448
  %v2450 = vmul.f32 %v2449, %v2449
  %v2452 = vsel %vm1283, %v2450, 0
  %2454 = vmatprep.subr.mxu0 0.0
  %2455 = vmatpush1.msra.mxu0 %v1218
  %2456 = vmatprep.subr.mxu0 0.0
  %2457 = vmatpush1.msra.mxu0 %v1219
  %2458 = vmatprep.subr.mxu0 0.0
  %2459 = vmatpush1.msra.mxu0 %v1220
  %2460 = vmatprep.subr.mxu0 0.0
  %2461 = vmatpush1.msra.mxu0 %v1221
  %2462 = vmatprep.subr.mxu0 0.0
  %2463 = vmatpush1.msra.mxu0 %v1222
  %2464 = vmatprep.subr.mxu0 0.0
  %2465 = vmatpush1.msra.mxu0 %v1223
  %2466 = vmatprep.subr.mxu0 0.0
  %2467 = vmatpush1.msra.mxu0 %v1224
  %2468 = vmatprep.subr.mxu0 0.0
  %2469 = vmatpush1.msra.mxu0 %v1225
  %2470 = vmatprep.subr.mxu0 0.0
  %2471 = vmatpush1.msra.mxu0 0.0
  %2472 = vmatprep.subr.mxu0 0.0
  %2473 = vmatpush1.msra.mxu0 0.0
  %2474 = vmatprep.subr.mxu0 0.0
  %2475 = vmatpush1.msra.mxu0 0.0
  %2476 = vmatprep.subr.mxu0 0.0
  %2477 = vmatpush1.msra.mxu0 0.0
  %2478 = vmatprep.subr.mxu0 0.0
  %2479 = vmatpush1.msra.mxu0 0.0
  %2480 = vmatprep.subr.mxu0 0.0
  %2481 = vmatpush1.msra.mxu0 0.0
  %2482 = vmatprep.subr.mxu0 0.0
  %2483 = vmatpush1.msra.mxu0 0.0
  %2484 = vmatprep.subr.mxu0 0.0
  %2485 = vmatpush1.msra.mxu0 0.0
  %2486 = vmatprep.subr.mxu0 0.0
  %2487 = vmatpush1.msra.mxu0 0.0
  %2488 = vmatprep.subr.mxu0 0.0
  %2489 = vmatpush1.msra.mxu0 0.0
  %2490 = vmatprep.subr.mxu0 0.0
  %2491 = vmatpush1.msra.mxu0 0.0
  %2492 = vmatprep.subr.mxu0 0.0
  %2493 = vmatpush1.msra.mxu0 0.0
  %2494 = vmatprep.subr.mxu0 0.0
  %2495 = vmatpush1.msra.mxu0 0.0
  %2496 = vmatprep.subr.mxu0 0.0
  %2497 = vmatpush1.msra.mxu0 0.0
  %2498 = vmatprep.subr.mxu0 0.0
  %2499 = vmatpush1.msra.mxu0 0.0
  %2500 = vmatprep.subr.mxu0 0.0
  %2501 = vmatpush1.msra.mxu0 0.0
  %2502 = vmatprep.subr.mxu0 0.0
  %2503 = vmatpush1.msra.mxu0 0.0
  %2504 = vmatprep.subr.mxu0 0.0
  %2505 = vmatpush1.msra.mxu0 0.0
  %2506 = vmatprep.subr.mxu0 0.0
  %2507 = vmatpush1.msra.mxu0 0.0
  %2508 = vmatprep.subr.mxu0 0.0
  %2509 = vmatpush1.msra.mxu0 0.0
  %2510 = vmatprep.subr.mxu0 0.0
  %2511 = vmatpush1.msra.mxu0 0.0
  %2512 = vmatprep.subr.mxu0 0.0
  %2513 = vmatpush1.msra.mxu0 0.0
  %2514 = vmatprep.subr.mxu0 0.0
  %2515 = vmatpush1.msra.mxu0 0.0
  %2516 = vmatprep.subr.mxu0 0.0
  %2517 = vmatpush1.msra.mxu0 0.0
  %2518 = vmatprep.mubr.f32.mxu0 0.0
  %2519 = vmatmul.mubr.f32.gmra.mrb[0].mxu0 %v2452
  %v2520 = vpop.f32.mrb[0].mxu0
  %v2521 = vadd.f32 0.0, %v2520
  %v2522 = vpop.f32.mrb[0].mxu0
  %2523 = vdwg.mxu0
  %v2524 = vrsqrt.pop %v2521
  %v2525 = vmul.f32 %v2521, %v2524
  %vm2526 = vcmp.eq.f32.partialorder %v2521, inf
  %v2527 = vsel %vm2526, %v2521, %v2525
  %vm2528 = vcmp.eq.f32.partialorder %v2521, 0.0
  %v2529 = vand.u32 %v2521, 2147483648
  %v2530 = vsel %vm2528, %v2529, %v2527
  %v2531 = vadd.f32 %v2521, 1.0
  %v2532 = vrcp.pop %v2531
  %v2533 = vmul.f32 %v2530, %v2532
  %v2534 = vmul.f32 %v2533, %v2449
  %2535 = vst.msk [vmem:[%s4] sm:$0x3] %vm1250, %v2534
  // Predicated region
  $region18: #{capsule_routing_forward.1} parent=0 // pred_check
    _
  $region19: #{capsule_routing_forward.1} parent=0 // pred_check_branch
    %2537 = sbr.rel (0) target = $region21
  $region20: #{capsule_routing_forward.1} parent=0 // pred_region
    _
  $region21: #{capsule_routing_forward.1} parent=0 // pred_fallthru
    _
  // Predicated region
  $region22: #{capsule_routing_forward.1} parent=0 // pred_check
    _
  $region23: #{capsule_routing_forward.1} parent=0 // pred_check_branch
    %2539 = sbr.rel (0) target = $region25
  $region24: #{capsule_routing_forward.1} parent=0 // pred_region
    _
  $region25: #{capsule_routing_forward.1} parent=0 // pred_fallthru
    _

</llo_original>
